<compile_context>
chip_gen: v7x
topology: tpu7x:2x2x1
jax: 0.10.0
libtpu: 0.0.40
codegen_flags: <defaults>
</compile_context>

<pallas_src>
import functools

import jax
import jax.numpy as jnp
from jax.experimental import pallas as pl
from jax.experimental.pallas import tpu as pltpu


# ---------------------------------- Kernel ----------------------------------

def _mlp_fused_kernel(x_ref, *refs, layer_meta, n_slabs):
    """Fused 9-layer MLP forward for one M tile, entirely in VMEM/vregs.

    refs layout: (w_slab_0..w_slab_{n_slabs-1}, bias_slab, o_ref)
      x_ref      : (TM, 128) bf16
      w_slab_s   : (rows_s, width_s) bf16  -- layers grouped by output width, BN folded in
      bias_slab  : (16, 512) f32           -- row li = layer li's bias (zero-padded lanes)
      o_ref      : (TM, 128) f32
    layer_meta: tuple of (slab_idx, row_off, in_pad, out_pad, relu) per layer (static).
    """
    w_slabs = refs[:n_slabs]
    b_ref = refs[n_slabs]
    o_ref = refs[n_slabs + 1]

    n = len(layer_meta)
    h = x_ref[...]                                   # bf16 activations
    for li, (s, roff, kp, np_, relu) in enumerate(layer_meta):
        w = w_slabs[s][roff:roff + kp, :np_]         # static, tile-aligned slice
        z = jnp.dot(h, w, preferred_element_type=jnp.float32)
        z = z + b_ref[li:li + 1, :np_]               # f32 bias add
        if relu:
            z = jnp.maximum(z, 0.0)
        h = z.astype(jnp.bfloat16) if li < n - 1 else z
    o_ref[...] = h.astype(o_ref.dtype)


def _round_up(n, m):
    return ((n + m - 1) // m) * m


@functools.partial(jax.jit, static_argnames=("layer_meta", "output_dim", "block_m"))
def simple_model_forward(x, w_slabs, b_slab, *, layer_meta, output_dim, block_m=256):
    """Run the fused MLP over a 1-D batch grid; output sliced to (batch, output_dim)."""
    batch, in_dim = x.shape
    in_pad = layer_meta[0][2]
    out_pad = layer_meta[-1][3]
    n_slabs = len(w_slabs)

    tm = min(block_m, _round_up(batch, 8))           # M tile (rows per grid step)
    m_pad = _round_up(batch, tm)
    x_pad = jnp.pad(x, ((0, m_pad - batch), (0, in_pad - in_dim))).astype(jnp.bfloat16)

    kernel = functools.partial(_mlp_fused_kernel, layer_meta=layer_meta, n_slabs=n_slabs)

    in_specs = [pl.BlockSpec((tm, in_pad), lambda i: (i, 0))]
    for slab in w_slabs:                             # constant block index -> DMA'd once,
        in_specs.append(pl.BlockSpec(slab.shape, lambda i: (0, 0)))  # stays VMEM-resident
    in_specs.append(pl.BlockSpec(b_slab.shape, lambda i: (0, 0)))

    out_padded = pl.pallas_call(
        kernel,
        out_shape=jax.ShapeDtypeStruct((m_pad, out_pad), jnp.float32),
        grid_spec=pltpu.PrefetchScalarGridSpec(
            num_scalar_prefetch=0,
            grid=(m_pad // tm,),
            in_specs=in_specs,
            out_specs=pl.BlockSpec((tm, out_pad), lambda i: (i, 0)),
        ),
        compiler_params=pltpu.CompilerParams(
            dimension_semantics=("parallel",)),       # v7x: shard batch tiles over 2 TCs
    )(x_pad, *w_slabs, b_slab)

    return out_padded[:batch, :output_dim]


# --------------------- Parameter construction (synthetic) --------------------

def _pad128(n):
    return ((n + 127) // 128) * 128


def init_linear(key, fan_in, fan_out):
    # PyTorch nn.Linear default: U(-1/sqrt(fan_in), 1/sqrt(fan_in)) for W and b.
    kw, kb = jax.random.split(key)
    bound = 1.0 / jnp.sqrt(fan_in)
    w = jax.random.uniform(kw, (fan_in, fan_out), jnp.float32, -bound, bound)
    b = jax.random.uniform(kb, (fan_out,), jnp.float32, -bound, bound)
    return w, b


def init_batchnorm(n):
    gamma = jnp.ones((n,), jnp.float32)
    beta = jnp.zeros((n,), jnp.float32)
    running_mean = jnp.zeros((n,), jnp.float32)
    running_var = jnp.ones((n,), jnp.float32)
    return gamma, beta, running_mean, running_var


def bn_to_scale_shift(gamma, beta, mean, var, eps=1e-5):
    inv_std = 1.0 / jnp.sqrt(var + eps)
    scale = gamma * inv_std
    shift = beta - mean * scale
    return scale, shift


def build_params(input_dim, output_dim, key):
    # Layer widths of SimpleModel.net
    dims = [input_dim, 64, 128, 256, 512, 256, 128, 64, 32, output_dim]
    n_layers = len(dims) - 1
    keys = jax.random.split(key, n_layers)

    folded = []    # unpadded f32 (w, b, relu), BN folded — reference check
    layers = []    # (w_pad f32 (kp,np), b_pad f32 (np,), relu, kp, np)

    for li in range(n_layers):
        fan_in, fan_out = dims[li], dims[li + 1]
        w, b = init_linear(keys[li], fan_in, fan_out)
        if li < 7:     # Linear + BatchNorm1d + ReLU (+ Dropout, identity in eval)
            gamma, beta, mean, var = init_batchnorm(fan_out)
            scale, shift = bn_to_scale_shift(gamma, beta, mean, var)
            w = w * scale[None, :]
            b = b * scale + shift
            relu = True
        elif li == 7:  # Linear(64, 32) + ReLU
            relu = True
        else:          # final Linear(32, output_dim)
            relu = False
        folded.append((w, b, relu))

        kp, np_ = _pad128(fan_in), _pad128(fan_out)
        w_p = jnp.zeros((kp, np_), jnp.float32).at[:fan_in, :fan_out].set(w)
        b_p = jnp.zeros((np_,), jnp.float32).at[:fan_out].set(b)
        layers.append((w_p, b_p, relu, kp, np_))

    # Pack weights into slabs grouped by output width (zero waste, 9 -> 3 DMA descriptors)
    # and all biases into one (16, 512) f32 slab (9 -> 1 descriptor).
    widths = sorted({np_ for (_, _, _, _, np_) in layers})
    slab_of = {w: i for i, w in enumerate(widths)}
    slab_rows = [0] * len(widths)
    meta, placements = [], []
    for (w_p, b_p, relu, kp, np_) in layers:
        s = slab_of[np_]
        roff = slab_rows[s]
        slab_rows[s] += kp
        placements.append((s, roff))
        meta.append((s, roff, kp, np_, bool(relu)))

    slabs = [jnp.zeros((slab_rows[i], widths[i]), jnp.float32) for i in range(len(widths))]
    b_slab = jnp.zeros((_round_up(n_layers, 8), max(widths)), jnp.float32)
    for li, (w_p, b_p, relu, kp, np_) in enumerate(layers):
        s, roff = placements[li]
        slabs[s] = slabs[s].at[roff:roff + kp, :].set(w_p)
        b_slab = b_slab.at[li, :np_].set(b_p)

    w_slabs = tuple(sl.astype(jnp.bfloat16) for sl in slabs)
    return w_slabs, b_slab, tuple(meta), folded


# ----------------------------------- Main ------------------------------------

if __name__ == "__main__":
    input_dim, output_dim = 32, 10

    key = jax.random.PRNGKey(0)
    k_params, k_x1, k_x2 = jax.random.split(key, 3)
    w_slabs, b_slab, layer_meta, folded = build_params(input_dim, output_dim, k_params)

    def ref_matched(x):
        # Identical padded/bf16 math in plain JAX (validates the kernel itself).
        in_pad = layer_meta[0][2]
        h = jnp.pad(x, ((0, 0), (0, in_pad - x.shape[1]))).astype(jnp.bfloat16)
        n = len(layer_meta)
        for li, (s, roff, kp, np_, relu) in enumerate(layer_meta):
            w = w_slabs[s][roff:roff + kp, :np_]
            z = jnp.dot(h, w, preferred_element_type=jnp.float32) + b_slab[li:li + 1, :np_]
            if relu:
                z = jnp.maximum(z, 0.0)
            h = z.astype(jnp.bfloat16) if li < n - 1 else z
        return h[:, :output_dim]

    def ref_f32(x):
        # Full-f32, unpadded eval-mode forward (BN folded, dropout identity).
        h = x
        for w, b, relu in folded:
            h = h @ w + b
            if relu:
                h = jnp.maximum(h, 0.0)
        return h

    # Small batch (single grid step).
    batch = 8
    x = jax.random.normal(k_x1, (batch, input_dim), jnp.float32)
    out = simple_model_forward(x, w_slabs, b_slab,
                               layer_meta=layer_meta, output_dim=output_dim)
    out = jax.block_until_ready(out)
    assert out.shape == (batch, output_dim)
    assert jnp.allclose(out, ref_matched(x), atol=1e-3, rtol=1e-3)
    assert jnp.allclose(out, ref_f32(x), atol=5e-2, rtol=5e-2)

    # Larger batch exercising the M grid (2 tiles of 256 rows; "parallel" axis, weights
    # stay VMEM-resident across tiles / are split across both TensorCores on v7x).
    batch2 = 512
    x2 = jax.random.normal(k_x2, (batch2, input_dim), jnp.float32)
    out2 = simple_model_forward(x2, w_slabs, b_slab,
                                layer_meta=layer_meta, output_dim=output_dim)
    out2 = jax.block_until_ready(out2)
    assert out2.shape == (batch2, output_dim)
    assert jnp.allclose(out2, ref_matched(x2), atol=1e-3, rtol=1e-3)

    print("KERNEL_OK")
</pallas_src>

<mosaic_0001>
module attributes {stable_mosaic.version = 11 : i64} {
  func.func @_mlp_fused_kernel(%arg0: i32, %arg1: memref<8x128xbf16, #tpu.memory_space<vmem>>, %arg2: memref<896x128xbf16, #tpu.memory_space<vmem>>, %arg3: memref<640x256xbf16, #tpu.memory_space<vmem>>, %arg4: memref<256x512xbf16, #tpu.memory_space<vmem>>, %arg5: memref<16x512xf32, #tpu.memory_space<vmem>>, %arg6: memref<8x128xf32, #tpu.memory_space<vmem>>) attributes {dimension_semantics = [#tpu.dimension_semantics<parallel>], iteration_bounds = array<i64: 1>, scalar_prefetch = 0 : i64, scratch_operands = 0 : i64, tpu.core_type = #tpu.core_type<tc>, window_params = [{transform_indices = @transform_0, window_bounds = array<i64: 8, 128>}, {pipeline_mode = #tpu.pipeline_mode<synchronous>, transform_indices = @transform_1, window_bounds = array<i64: 896, 128>}, {pipeline_mode = #tpu.pipeline_mode<synchronous>, transform_indices = @transform_2, window_bounds = array<i64: 640, 256>}, {pipeline_mode = #tpu.pipeline_mode<synchronous>, transform_indices = @transform_3, window_bounds = array<i64: 256, 512>}, {pipeline_mode = #tpu.pipeline_mode<synchronous>, transform_indices = @transform_4, window_bounds = array<i64: 16, 512>}, {transform_indices = @transform_5, window_bounds = array<i64: 8, 128>}]} {
    %c0 = arith.constant 0 : index
    %c0_0 = arith.constant 0 : index
    %0 = vector.load %arg1[%c0, %c0_0] : memref<8x128xbf16, #tpu.memory_space<vmem>>, vector<8x128xbf16>
    %c0_1 = arith.constant 0 : index
    %c0_2 = arith.constant 0 : index
    %1 = vector.load %arg2[%c0_1, %c0_2] : memref<896x128xbf16, #tpu.memory_space<vmem>>, vector<128x128xbf16>
    %cst = arith.constant dense<0.000000e+00> : vector<8x128xf32>
    %2 = tpu.matmul %0, %1, %cst {dimension_numbers = #tpu.dot_dimension_numbers<[1], [0], [0], [1], [0, 0, 1, 1], [], []>} : vector<8x128xbf16>, vector<128x128xbf16>, vector<8x128xf32> -> vector<8x128xf32>
    %c0_3 = arith.constant 0 : index
    %c0_4 = arith.constant 0 : index
    %3 = vector.load %arg5[%c0_3, %c0_4] : memref<16x512xf32, #tpu.memory_space<vmem>>, vector<1x128xf32>
    %4 = vector.broadcast %3 : vector<1x128xf32> to vector<8x128xf32>
    %5 = arith.addf %2, %4 : vector<8x128xf32>
    %cst_5 = arith.constant 0.000000e+00 : f32
    %6 = vector.broadcast %cst_5 : f32 to vector<8x128xf32>
    %7 = arith.maximumf %5, %6 : vector<8x128xf32>
    %8 = arith.truncf %7 : vector<8x128xf32> to vector<8x128xbf16>
    %c128 = arith.constant 128 : index
    %c0_6 = arith.constant 0 : index
    %9 = vector.load %arg2[%c128, %c0_6] : memref<896x128xbf16, #tpu.memory_space<vmem>>, vector<128x128xbf16>
    %cst_7 = arith.constant dense<0.000000e+00> : vector<8x128xf32>
    %10 = tpu.matmul %8, %9, %cst_7 {dimension_numbers = #tpu.dot_dimension_numbers<[1], [0], [0], [1], [0, 0, 1, 1], [], []>} : vector<8x128xbf16>, vector<128x128xbf16>, vector<8x128xf32> -> vector<8x128xf32>
    %c1 = arith.constant 1 : index
    %c0_8 = arith.constant 0 : index
    %11 = vector.load %arg5[%c1, %c0_8] : memref<16x512xf32, #tpu.memory_space<vmem>>, vector<1x128xf32>
    %12 = vector.broadcast %11 : vector<1x128xf32> to vector<8x128xf32>
    %13 = arith.addf %10, %12 : vector<8x128xf32>
    %cst_9 = arith.constant 0.000000e+00 : f32
    %14 = vector.broadcast %cst_9 : f32 to vector<8x128xf32>
    %15 = arith.maximumf %13, %14 : vector<8x128xf32>
    %16 = arith.truncf %15 : vector<8x128xf32> to vector<8x128xbf16>
    %c0_10 = arith.constant 0 : index
    %c0_11 = arith.constant 0 : index
    %17 = vector.load %arg3[%c0_10, %c0_11] : memref<640x256xbf16, #tpu.memory_space<vmem>>, vector<128x256xbf16>
    %cst_12 = arith.constant dense<0.000000e+00> : vector<8x256xf32>
    %18 = tpu.matmul %16, %17, %cst_12 {dimension_numbers = #tpu.dot_dimension_numbers<[1], [0], [0], [1], [0, 0, 1, 1], [], []>} : vector<8x128xbf16>, vector<128x256xbf16>, vector<8x256xf32> -> vector<8x256xf32>
    %c2 = arith.constant 2 : index
    %c0_13 = arith.constant 0 : index
    %19 = vector.load %arg5[%c2, %c0_13] : memref<16x512xf32, #tpu.memory_space<vmem>>, vector<1x256xf32>
    %20 = vector.broadcast %19 : vector<1x256xf32> to vector<8x256xf32>
    %21 = arith.addf %18, %20 : vector<8x256xf32>
    %cst_14 = arith.constant 0.000000e+00 : f32
    %22 = vector.broadcast %cst_14 : f32 to vector<8x256xf32>
    %23 = arith.maximumf %21, %22 : vector<8x256xf32>
    %24 = arith.truncf %23 : vector<8x256xf32> to vector<8x256xbf16>
    %c0_15 = arith.constant 0 : index
    %c0_16 = arith.constant 0 : index
    %25 = vector.load %arg4[%c0_15, %c0_16] : memref<256x512xbf16, #tpu.memory_space<vmem>>, vector<256x512xbf16>
    %cst_17 = arith.constant dense<0.000000e+00> : vector<8x512xf32>
    %26 = tpu.matmul %24, %25, %cst_17 {dimension_numbers = #tpu.dot_dimension_numbers<[1], [0], [0], [1], [0, 0, 1, 1], [], []>} : vector<8x256xbf16>, vector<256x512xbf16>, vector<8x512xf32> -> vector<8x512xf32>
    %c3 = arith.constant 3 : index
    %c0_18 = arith.constant 0 : index
    %27 = vector.load %arg5[%c3, %c0_18] : memref<16x512xf32, #tpu.memory_space<vmem>>, vector<1x512xf32>
    %28 = vector.broadcast %27 : vector<1x512xf32> to vector<8x512xf32>
    %29 = arith.addf %26, %28 : vector<8x512xf32>
    %cst_19 = arith.constant 0.000000e+00 : f32
    %30 = vector.broadcast %cst_19 : f32 to vector<8x512xf32>
    %31 = arith.maximumf %29, %30 : vector<8x512xf32>
    %32 = arith.truncf %31 : vector<8x512xf32> to vector<8x512xbf16>
    %c128_20 = arith.constant 128 : index
    %c0_21 = arith.constant 0 : index
    %33 = vector.load %arg3[%c128_20, %c0_21] : memref<640x256xbf16, #tpu.memory_space<vmem>>, vector<512x256xbf16>
    %cst_22 = arith.constant dense<0.000000e+00> : vector<8x256xf32>
    %34 = tpu.matmul %32, %33, %cst_22 {dimension_numbers = #tpu.dot_dimension_numbers<[1], [0], [0], [1], [0, 0, 1, 1], [], []>} : vector<8x512xbf16>, vector<512x256xbf16>, vector<8x256xf32> -> vector<8x256xf32>
    %c4 = arith.constant 4 : index
    %c0_23 = arith.constant 0 : index
    %35 = vector.load %arg5[%c4, %c0_23] : memref<16x512xf32, #tpu.memory_space<vmem>>, vector<1x256xf32>
    %36 = vector.broadcast %35 : vector<1x256xf32> to vector<8x256xf32>
    %37 = arith.addf %34, %36 : vector<8x256xf32>
    %cst_24 = arith.constant 0.000000e+00 : f32
    %38 = vector.broadcast %cst_24 : f32 to vector<8x256xf32>
    %39 = arith.maximumf %37, %38 : vector<8x256xf32>
    %40 = arith.truncf %39 : vector<8x256xf32> to vector<8x256xbf16>
    %c256 = arith.constant 256 : index
    %c0_25 = arith.constant 0 : index
    %41 = vector.load %arg2[%c256, %c0_25] : memref<896x128xbf16, #tpu.memory_space<vmem>>, vector<256x128xbf16>
    %cst_26 = arith.constant dense<0.000000e+00> : vector<8x128xf32>
    %42 = tpu.matmul %40, %41, %cst_26 {dimension_numbers = #tpu.dot_dimension_numbers<[1], [0], [0], [1], [0, 0, 1, 1], [], []>} : vector<8x256xbf16>, vector<256x128xbf16>, vector<8x128xf32> -> vector<8x128xf32>
    %c5 = arith.constant 5 : index
    %c0_27 = arith.constant 0 : index
    %43 = vector.load %arg5[%c5, %c0_27] : memref<16x512xf32, #tpu.memory_space<vmem>>, vector<1x128xf32>
    %44 = vector.broadcast %43 : vector<1x128xf32> to vector<8x128xf32>
    %45 = arith.addf %42, %44 : vector<8x128xf32>
    %cst_28 = arith.constant 0.000000e+00 : f32
    %46 = vector.broadcast %cst_28 : f32 to vector<8x128xf32>
    %47 = arith.maximumf %45, %46 : vector<8x128xf32>
    %48 = arith.truncf %47 : vector<8x128xf32> to vector<8x128xbf16>
    %c512 = arith.constant 512 : index
    %c0_29 = arith.constant 0 : index
    %49 = vector.load %arg2[%c512, %c0_29] : memref<896x128xbf16, #tpu.memory_space<vmem>>, vector<128x128xbf16>
    %cst_30 = arith.constant dense<0.000000e+00> : vector<8x128xf32>
    %50 = tpu.matmul %48, %49, %cst_30 {dimension_numbers = #tpu.dot_dimension_numbers<[1], [0], [0], [1], [0, 0, 1, 1], [], []>} : vector<8x128xbf16>, vector<128x128xbf16>, vector<8x128xf32> -> vector<8x128xf32>
    %c6 = arith.constant 6 : index
    %c0_31 = arith.constant 0 : index
    %51 = vector.load %arg5[%c6, %c0_31] : memref<16x512xf32, #tpu.memory_space<vmem>>, vector<1x128xf32>
    %52 = vector.broadcast %51 : vector<1x128xf32> to vector<8x128xf32>
    %53 = arith.addf %50, %52 : vector<8x128xf32>
    %cst_32 = arith.constant 0.000000e+00 : f32
    %54 = vector.broadcast %cst_32 : f32 to vector<8x128xf32>
    %55 = arith.maximumf %53, %54 : vector<8x128xf32>
    %56 = arith.truncf %55 : vector<8x128xf32> to vector<8x128xbf16>
    %c640 = arith.constant 640 : index
    %c0_33 = arith.constant 0 : index
    %57 = vector.load %arg2[%c640, %c0_33] : memref<896x128xbf16, #tpu.memory_space<vmem>>, vector<128x128xbf16>
    %cst_34 = arith.constant dense<0.000000e+00> : vector<8x128xf32>
    %58 = tpu.matmul %56, %57, %cst_34 {dimension_numbers = #tpu.dot_dimension_numbers<[1], [0], [0], [1], [0, 0, 1, 1], [], []>} : vector<8x128xbf16>, vector<128x128xbf16>, vector<8x128xf32> -> vector<8x128xf32>
    %c7 = arith.constant 7 : index
    %c0_35 = arith.constant 0 : index
    %59 = vector.load %arg5[%c7, %c0_35] : memref<16x512xf32, #tpu.memory_space<vmem>>, vector<1x128xf32>
    %60 = vector.broadcast %59 : vector<1x128xf32> to vector<8x128xf32>
    %61 = arith.addf %58, %60 : vector<8x128xf32>
    %cst_36 = arith.constant 0.000000e+00 : f32
    %62 = vector.broadcast %cst_36 : f32 to vector<8x128xf32>
    %63 = arith.maximumf %61, %62 : vector<8x128xf32>
    %64 = arith.truncf %63 : vector<8x128xf32> to vector<8x128xbf16>
    %c768 = arith.constant 768 : index
    %c0_37 = arith.constant 0 : index
    %65 = vector.load %arg2[%c768, %c0_37] : memref<896x128xbf16, #tpu.memory_space<vmem>>, vector<128x128xbf16>
    %cst_38 = arith.constant dense<0.000000e+00> : vector<8x128xf32>
    %66 = tpu.matmul %64, %65, %cst_38 {dimension_numbers = #tpu.dot_dimension_numbers<[1], [0], [0], [1], [0, 0, 1, 1], [], []>} : vector<8x128xbf16>, vector<128x128xbf16>, vector<8x128xf32> -> vector<8x128xf32>
    %c8 = arith.constant 8 : index
    %c0_39 = arith.constant 0 : index
    %67 = vector.load %arg5[%c8, %c0_39] : memref<16x512xf32, #tpu.memory_space<vmem>>, vector<1x128xf32>
    %68 = vector.broadcast %67 : vector<1x128xf32> to vector<8x128xf32>
    %69 = arith.addf %66, %68 : vector<8x128xf32>
    %c0_40 = arith.constant 0 : index
    %c0_41 = arith.constant 0 : index
    %70 = vector.load %arg6[%c0_40, %c0_41] : memref<8x128xf32, #tpu.memory_space<vmem>>, vector<8x128xf32>
    tpu.vector_store %arg6[%c0_40, %c0_41], %69 {strides = array<i32>} : memref<8x128xf32, #tpu.memory_space<vmem>>, vector<8x128xf32>,
    return
  }
  func.func @transform_0(%arg0: i32) -> (i32, i32) {
    %c0_i32 = arith.constant 0 : i32
    %c0_i32_0 = arith.constant 0 : i32
    return %arg0, %c0_i32 : i32, i32
  }
  func.func @transform_1(%arg0: i32) -> (i32, i32) {
    %c0_i32 = arith.constant 0 : i32
    %c0_i32_0 = arith.constant 0 : i32
    %c0_i32_1 = arith.constant 0 : i32
    return %c0_i32, %c0_i32_0 : i32, i32
  }
  func.func @transform_2(%arg0: i32) -> (i32, i32) {
    %c0_i32 = arith.constant 0 : i32
    %c0_i32_0 = arith.constant 0 : i32
    %c0_i32_1 = arith.constant 0 : i32
    return %c0_i32, %c0_i32_0 : i32, i32
  }
  func.func @transform_3(%arg0: i32) -> (i32, i32) {
    %c0_i32 = arith.constant 0 : i32
    %c0_i32_0 = arith.constant 0 : i32
    %c0_i32_1 = arith.constant 0 : i32
    return %c0_i32, %c0_i32_0 : i32, i32
  }
  func.func @transform_4(%arg0: i32) -> (i32, i32) {
    %c0_i32 = arith.constant 0 : i32
    %c0_i32_0 = arith.constant 0 : i32
    %c0_i32_1 = arith.constant 0 : i32
    return %c0_i32, %c0_i32_0 : i32, i32
  }
  func.func @transform_5(%arg0: i32) -> (i32, i32) {
    %c0_i32 = arith.constant 0 : i32
    %c0_i32_0 = arith.constant 0 : i32
    return %arg0, %c0_i32 : i32, i32
  }
}

</mosaic_0001>

<llo_original>
// kernel: simple_model_forward.1
$region0: #{simple_model_forward.1}
  #allocation0 [shape = 'u32[]', space=smem, size = 0x4, offset = 0x4, fixed_abs, tag = 'smem constant byte address 0x4 - core index']
  #allocation1 [shape = 'u32[144,128]{1,0:T(1,128)}', space=vmem, size = 0x12000, scoped, tag = 'internal scratch']
  %s0 = inlined_call_operand.vmem [shape: bf16[8,128], index: 0, kind: input, shape index: {}]
  %s1 = inlined_call_operand.hbm [shape: bf16[896,128], index: 1, kind: input, shape index: {}]
  %s2 = inlined_call_operand.hbm [shape: bf16[640,256], index: 2, kind: input, shape index: {}]
  %s3 = inlined_call_operand.hbm [shape: bf16[256,512], index: 3, kind: input, shape index: {}]
  %s4 = inlined_call_operand.hbm [shape: f32[16,512], index: 4, kind: input, shape index: {}]
  %s5 = inlined_call_operand.hbm [shape: f32[8,128], index: 5, kind: output, shape index: {}]
  %s6 = sld [smem:[#allocation0]]
  $region46: #{simple_model_forward.1} parent=0
    _
  %s8 = ssub.s32 1, %s6
  %s9 = scalar_select 0, %s8, %s6
  $region1: #{simple_model_forward.1} parent=0
    #allocation2 [shape = 'u8[229376]{0}', space=vmem, size = 0x38000, scoped, tag = 'input window, operand 1, single buffered']
    #allocation3 [shape = 's32[1]{0}', space=sflag, size = 0x4, scoped, tag = 'scoped memory for simple_model_forward.1']
    #allocation4 [shape = 's32[1]{0}', space=sflag, size = 0x4, scoped, tag = 'scoped memory for simple_model_forward.1']
    #allocation5 [shape = 'u8[327680]{0}', space=vmem, size = 0x50000, scoped, tag = 'input window, operand 2, single buffered']
    #allocation6 [shape = 's32[1]{0}', space=sflag, size = 0x4, scoped, tag = 'scoped memory for simple_model_forward.1']
    #allocation7 [shape = 'u8[262144]{0}', space=vmem, size = 0x40000, scoped, tag = 'input window, operand 3, single buffered']
    #allocation8 [shape = 'u8[32768]{0}', space=vmem, size = 0x8000, scoped, tag = 'input window, operand 4, single buffered']
    #allocation9 [shape = 's32[1]{0}', space=sflag, size = 0x4, scoped, tag = 'scoped memory for simple_model_forward.1']
    #allocation10 [shape = 'u8[4096]{0}', space=vmem, size = 0x1000, scoped, tag = 'output window, operand 0, single buffered']
    %10 = vsyncpa [#allocation3], 0
    %11 = vsyncpa [#allocation6], 0
    %12 = vsyncpa [#allocation9], 0
    %13 = vsyncpa [#allocation4], 0
    // Predicated region
    $region2: #{simple_model_forward.1} parent=1 // pred_check
      _
    $region3: #{simple_model_forward.1} parent=1 // pred_check_branch
      %15 = sbr.rel (0) target = $region5
    $region4: #{simple_model_forward.1} parent=1 // pred_region
      _
    $region5: #{simple_model_forward.1} parent=1 // pred_fallthru
      _
    // Predicated region
    $region6: #{simple_model_forward.1} parent=1 // pred_check
      _
    $region7: #{simple_model_forward.1} parent=1 // pred_check_branch
      %17 = sbr.rel (0) target = $region9
    $region8: #{simple_model_forward.1} parent=1 // pred_region
      %s19 = ssub.s32 7168, 7168
      %20 = vsyncadd [#allocation3], %s19
      %s21 = sshll.u32 [#allocation2], 4
      %s22 = int_to_ptr.vmem [resolvable:$true] %s21
      %27 = dma.hbm_to_vmem [thread:$0]  %s1, 7168, %s22, [#allocation3], 64, 64, 4
    $region9: #{simple_model_forward.1} parent=1 // pred_fallthru
      _
    // Predicated region
    $region10: #{simple_model_forward.1} parent=1 // pred_check
      _
    $region11: #{simple_model_forward.1} parent=1 // pred_check_branch
      %29 = sbr.rel (0) target = $region13
    $region12: #{simple_model_forward.1} parent=1 // pred_region
      %s31 = ssub.s32 10240, 10240
      %32 = vsyncadd [#allocation6], %s31
      %s33 = sshll.u32 [#allocation5], 4
      %s34 = int_to_ptr.vmem [resolvable:$true] %s33
      %39 = dma.hbm_to_vmem [thread:$0]  %s2, 10240, %s34, [#allocation6], 128, 128, 8
    $region13: #{simple_model_forward.1} parent=1 // pred_fallthru
      _
    // Predicated region
    $region14: #{simple_model_forward.1} parent=1 // pred_check
      _
    $region15: #{simple_model_forward.1} parent=1 // pred_check_branch
      %41 = sbr.rel (0) target = $region17
    $region16: #{simple_model_forward.1} parent=1 // pred_region
      %s43 = ssub.s32 8192, 8192
      %44 = vsyncadd [#allocation6], %s43
      %s45 = sshll.u32 [#allocation7], 4
      %s46 = int_to_ptr.vmem [resolvable:$true] %s45
      %51 = dma.hbm_to_vmem [thread:$0]  %s3, 8192, %s46, [#allocation6], 256, 256, 16
    $region17: #{simple_model_forward.1} parent=1 // pred_fallthru
      _
    // Predicated region
    $region18: #{simple_model_forward.1} parent=1 // pred_check
      _
    $region19: #{simple_model_forward.1} parent=1 // pred_check_branch
      %53 = sbr.rel (0) target = $region21
    $region20: #{simple_model_forward.1} parent=1 // pred_region
      %s55 = ssub.s32 1024, 1024
      %56 = vsyncadd [#allocation9], %s55
      %s57 = sshll.u32 [#allocation8], 4
      %s58 = int_to_ptr.vmem [resolvable:$true] %s57
      %63 = dma.hbm_to_vmem [thread:$0]  %s4, 1024, %s58, [#allocation9], 512, 512, 32
    $region21: #{simple_model_forward.1} parent=1 // pred_fallthru
      _
    // Predicated region
    $region22: #{simple_model_forward.1} parent=1 // pred_check
      _
    $region23: #{simple_model_forward.1} parent=1 // pred_check_branch
      %65 = sbr.rel (0) target = $region25
    $region24: #{simple_model_forward.1} parent=1 // pred_region
      %66 = dma.done [#allocation3], 7168
    $region25: #{simple_model_forward.1} parent=1 // pred_fallthru
      _
    // Predicated region
    $region26: #{simple_model_forward.1} parent=1 // pred_check
      _
    $region27: #{simple_model_forward.1} parent=1 // pred_check_branch
      %68 = sbr.rel (0) target = $region29
    $region28: #{simple_model_forward.1} parent=1 // pred_region
      %69 = dma.done [#allocation6], 10240
    $region29: #{simple_model_forward.1} parent=1 // pred_fallthru
      _
    // Predicated region
    $region30: #{simple_model_forward.1} parent=1 // pred_check
      _
    $region31: #{simple_model_forward.1} parent=1 // pred_check_branch
      %71 = sbr.rel (0) target = $region33
    $region32: #{simple_model_forward.1} parent=1 // pred_region
      %72 = dma.done [#allocation6], 8192
    $region33: #{simple_model_forward.1} parent=1 // pred_fallthru
      _
    // Predicated region
    $region34: #{simple_model_forward.1} parent=1 // pred_check
      _
    $region35: #{simple_model_forward.1} parent=1 // pred_check_branch
      %74 = sbr.rel (0) target = $region37
    $region36: #{simple_model_forward.1} parent=1 // pred_region
      %75 = dma.done [#allocation9], 1024
    $region37: #{simple_model_forward.1} parent=1 // pred_fallthru
      _
    %v77 = vld [vmem:[%s0] sm:$0xf]
    %v78 = vld [vmem:[#allocation2] sm:$0xf]
    %v79 = vld [vmem:[#allocation2 + $0x4] sm:$0xf]
    %v80 = vld [vmem:[#allocation2 + $0x8] sm:$0xf]
    %v81 = vld [vmem:[#allocation2 + $0xc] sm:$0xf]
    %v82 = vld [vmem:[#allocation2 + $0x10] sm:$0xf]
    %v83 = vld [vmem:[#allocation2 + $0x14] sm:$0xf]
    %v84 = vld [vmem:[#allocation2 + $0x18] sm:$0xf]
    %v85 = vld [vmem:[#allocation2 + $0x1c] sm:$0xf]
    %v86 = vld [vmem:[#allocation2 + $0x20] sm:$0xf]
    %v87 = vld [vmem:[#allocation2 + $0x24] sm:$0xf]
    %v88 = vld [vmem:[#allocation2 + $0x28] sm:$0xf]
    %v89 = vld [vmem:[#allocation2 + $0x2c] sm:$0xf]
    %v90 = vld [vmem:[#allocation2 + $0x30] sm:$0xf]
    %v91 = vld [vmem:[#allocation2 + $0x34] sm:$0xf]
    %v92 = vld [vmem:[#allocation2 + $0x38] sm:$0xf]
    %v93 = vld [vmem:[#allocation2 + $0x3c] sm:$0xf]
    %v94 = vld [vmem:[#allocation8] ss:$0 sm:$0xff]
    %v111 = vunpack.c.l.b16 %v78
    %v112 = vunpack.c.l.b16 %v79
    %v113 = vunpack.c.l.b16 %v80
    %v114 = vunpack.c.l.b16 %v81
    %v115 = vunpack.c.l.b16 %v82
    %v116 = vunpack.c.l.b16 %v83
    %v117 = vunpack.c.l.b16 %v84
    %v118 = vunpack.c.l.b16 %v85
    %v119 = vunpack.c.l.b16 %v86
    %v120 = vunpack.c.l.b16 %v87
    %v121 = vunpack.c.l.b16 %v88
    %v122 = vunpack.c.l.b16 %v89
    %v123 = vunpack.c.l.b16 %v90
    %v124 = vunpack.c.l.b16 %v91
    %v125 = vunpack.c.l.b16 %v92
    %v126 = vunpack.c.l.b16 %v93
    %v127 = vpack.c.b16 %v112, %v111
    %v128 = vpack.c.b16 %v114, %v113
    %v129 = vpack.c.b16 %v116, %v115
    %v130 = vpack.c.b16 %v118, %v117
    %v131 = vpack.c.b16 %v120, %v119
    %v132 = vpack.c.b16 %v122, %v121
    %v133 = vpack.c.b16 %v124, %v123
    %v134 = vpack.c.b16 %v126, %v125
    %143 = vmatprep.subr.bf16.mxu0 0
    %144 = vmatpush1.bf16.msra.mxu0 %v127
    %145 = vmatprep.subr.bf16.mxu0 0
    %146 = vmatpush1.bf16.msra.mxu0 %v128
    %147 = vmatprep.subr.bf16.mxu0 0
    %148 = vmatpush1.bf16.msra.mxu0 %v129
    %149 = vmatprep.subr.bf16.mxu0 0
    %150 = vmatpush1.bf16.msra.mxu0 %v130
    %151 = vmatprep.subr.bf16.mxu0 0
    %152 = vmatpush1.bf16.msra.mxu0 %v131
    %153 = vmatprep.subr.bf16.mxu0 0
    %154 = vmatpush1.bf16.msra.mxu0 %v132
    %155 = vmatprep.subr.bf16.mxu0 0
    %156 = vmatpush1.bf16.msra.mxu0 %v133
    %157 = vmatprep.subr.bf16.mxu0 0
    %158 = vmatpush1.bf16.msra.mxu0 %v134
    %159 = vmatprep.subr.bf16.mxu0 0
    %160 = vmatpush1.bf16.msra.mxu0 0
    %161 = vmatprep.subr.bf16.mxu0 0
    %162 = vmatpush1.bf16.msra.mxu0 0
    %163 = vmatprep.subr.bf16.mxu0 0
    %164 = vmatpush1.bf16.msra.mxu0 0
    %165 = vmatprep.subr.bf16.mxu0 0
    %166 = vmatpush1.bf16.msra.mxu0 0
    %167 = vmatprep.subr.bf16.mxu0 0
    %168 = vmatpush1.bf16.msra.mxu0 0
    %169 = vmatprep.subr.bf16.mxu0 0
    %170 = vmatpush1.bf16.msra.mxu0 0
    %171 = vmatprep.subr.bf16.mxu0 0
    %172 = vmatpush1.bf16.msra.mxu0 0
    %173 = vmatprep.subr.bf16.mxu0 0
    %174 = vmatpush1.bf16.msra.mxu0 0
    %175 = vmatprep.mubr.bf16.mxu0 0
    %176 = vmatmul.mubr.bf16.gmra.mrb[0].mxu0 %v77
    %v177 = vpop.f32.mrb[0].mxu0
    %v178 = vadd.f32 %v94, %v177
    %v179 = vpop.f32.mrb[0].mxu0
    %v180 = vpop.f32.mrb[0].mxu0
    %v181 = vpop.f32.mrb[0].mxu0
    %182 = vdwg.mxu0
    %v183 = vmax.f32 %v178, 0.0
    %v184 = vpack.c.bf16 %v183, %v183
    %v185 = vld [vmem:[#allocation2 + $0x40] sm:$0xf]
    %v186 = vld [vmem:[#allocation2 + $0x44] sm:$0xf]
    %v187 = vld [vmem:[#allocation2 + $0x48] sm:$0xf]
    %v188 = vld [vmem:[#allocation2 + $0x4c] sm:$0xf]
    %v189 = vld [vmem:[#allocation2 + $0x50] sm:$0xf]
    %v190 = vld [vmem:[#allocation2 + $0x54] sm:$0xf]
    %v191 = vld [vmem:[#allocation2 + $0x58] sm:$0xf]
    %v192 = vld [vmem:[#allocation2 + $0x5c] sm:$0xf]
    %v193 = vld [vmem:[#allocation2 + $0x60] sm:$0xf]
    %v194 = vld [vmem:[#allocation2 + $0x64] sm:$0xf]
    %v195 = vld [vmem:[#allocation2 + $0x68] sm:$0xf]
    %v196 = vld [vmem:[#allocation2 + $0x6c] sm:$0xf]
    %v197 = vld [vmem:[#allocation2 + $0x70] sm:$0xf]
    %v198 = vld [vmem:[#allocation2 + $0x74] sm:$0xf]
    %v199 = vld [vmem:[#allocation2 + $0x78] sm:$0xf]
    %v200 = vld [vmem:[#allocation2 + $0x7c] sm:$0xf]
    %v201 = vld [vmem:[#allocation8 + $0x1] ss:$0 sm:$0xff]
    %v218 = vunpack.c.l.b16 %v185
    %v219 = vunpack.c.l.b16 %v186
    %v220 = vunpack.c.l.b16 %v187
    %v221 = vunpack.c.l.b16 %v188
    %v222 = vunpack.c.l.b16 %v189
    %v223 = vunpack.c.l.b16 %v190
    %v224 = vunpack.c.l.b16 %v191
    %v225 = vunpack.c.l.b16 %v192
    %v226 = vunpack.c.l.b16 %v193
    %v227 = vunpack.c.l.b16 %v194
    %v228 = vunpack.c.l.b16 %v195
    %v229 = vunpack.c.l.b16 %v196
    %v230 = vunpack.c.l.b16 %v197
    %v231 = vunpack.c.l.b16 %v198
    %v232 = vunpack.c.l.b16 %v199
    %v233 = vunpack.c.l.b16 %v200
    %v234 = vpack.c.b16 %v219, %v218
    %v235 = vpack.c.b16 %v221, %v220
    %v236 = vpack.c.b16 %v223, %v222
    %v237 = vpack.c.b16 %v225, %v224
    %v238 = vpack.c.b16 %v227, %v226
    %v239 = vpack.c.b16 %v229, %v228
    %v240 = vpack.c.b16 %v231, %v230
    %v241 = vpack.c.b16 %v233, %v232
    %250 = vmatprep.subr.bf16.mxu0 0
    %251 = vmatpush1.bf16.msra.mxu0 %v234
    %252 = vmatprep.subr.bf16.mxu0 0
    %253 = vmatpush1.bf16.msra.mxu0 %v235
    %254 = vmatprep.subr.bf16.mxu0 0
    %255 = vmatpush1.bf16.msra.mxu0 %v236
    %256 = vmatprep.subr.bf16.mxu0 0
    %257 = vmatpush1.bf16.msra.mxu0 %v237
    %258 = vmatprep.subr.bf16.mxu0 0
    %259 = vmatpush1.bf16.msra.mxu0 %v238
    %260 = vmatprep.subr.bf16.mxu0 0
    %261 = vmatpush1.bf16.msra.mxu0 %v239
    %262 = vmatprep.subr.bf16.mxu0 0
    %263 = vmatpush1.bf16.msra.mxu0 %v240
    %264 = vmatprep.subr.bf16.mxu0 0
    %265 = vmatpush1.bf16.msra.mxu0 %v241
    %266 = vmatprep.subr.bf16.mxu0 0
    %267 = vmatpush1.bf16.msra.mxu0 0
    %268 = vmatprep.subr.bf16.mxu0 0
    %269 = vmatpush1.bf16.msra.mxu0 0
    %270 = vmatprep.subr.bf16.mxu0 0
    %271 = vmatpush1.bf16.msra.mxu0 0
    %272 = vmatprep.subr.bf16.mxu0 0
    %273 = vmatpush1.bf16.msra.mxu0 0
    %274 = vmatprep.subr.bf16.mxu0 0
    %275 = vmatpush1.bf16.msra.mxu0 0
    %276 = vmatprep.subr.bf16.mxu0 0
    %277 = vmatpush1.bf16.msra.mxu0 0
    %278 = vmatprep.subr.bf16.mxu0 0
    %279 = vmatpush1.bf16.msra.mxu0 0
    %280 = vmatprep.subr.bf16.mxu0 0
    %281 = vmatpush1.bf16.msra.mxu0 0
    %282 = vmatprep.mubr.bf16.mxu0 0
    %283 = vmatmul.mubr.bf16.gmra.mrb[0].mxu0 %v184
    %v284 = vpop.f32.mrb[0].mxu0
    %v285 = vadd.f32 %v201, %v284
    %v286 = vpop.f32.mrb[0].mxu0
    %v287 = vpop.f32.mrb[0].mxu0
    %v288 = vpop.f32.mrb[0].mxu0
    %289 = vdwg.mxu0
    %v290 = vmax.f32 %v285, 0.0
    %v291 = vpack.c.bf16 %v290, %v290
    %v292 = vld [vmem:[#allocation5] sm:$0xff]
    %v293 = vld [vmem:[#allocation5 + $0x8] sm:$0xff]
    %v294 = vld [vmem:[#allocation5 + $0x10] sm:$0xff]
    %v295 = vld [vmem:[#allocation5 + $0x18] sm:$0xff]
    %v296 = vld [vmem:[#allocation5 + $0x20] sm:$0xff]
    %v297 = vld [vmem:[#allocation5 + $0x28] sm:$0xff]
    %v298 = vld [vmem:[#allocation5 + $0x30] sm:$0xff]
    %v299 = vld [vmem:[#allocation5 + $0x38] sm:$0xff]
    %v300 = vld [vmem:[#allocation5 + $0x40] sm:$0xff]
    %v301 = vld [vmem:[#allocation5 + $0x48] sm:$0xff]
    %v302 = vld [vmem:[#allocation5 + $0x50] sm:$0xff]
    %v303 = vld [vmem:[#allocation5 + $0x58] sm:$0xff]
    %v304 = vld [vmem:[#allocation5 + $0x60] sm:$0xff]
    %v305 = vld [vmem:[#allocation5 + $0x68] sm:$0xff]
    %v306 = vld [vmem:[#allocation5 + $0x70] sm:$0xff]
    %v307 = vld [vmem:[#allocation5 + $0x78] sm:$0xff]
    %s308 = scalar_lea.vmem [#allocation8], 2
    %v309 = vld [vmem:[%s308] ss:$8 sm:$0x3]
    %v311 = vlaneseq
    %v312 = vshrl.u32 %v311, 7
    %v313 = vsub.s32 0, %v312
    %v314 = vrot.slane %v309, %v313
    %v315 = vlaneseq
    %v316 = vshrl.u32 %v315, 7
    %v317 = vsub.s32 1, %v316
    %v318 = vrot.slane %v309, %v317
    %v337 = vunpack.c.l.b16 %v292
    %v338 = vunpack.c.h.b16 %v292
    %v339 = vunpack.c.l.b16 %v293
    %v340 = vunpack.c.h.b16 %v293
    %v341 = vunpack.c.l.b16 %v294
    %v342 = vunpack.c.h.b16 %v294
    %v343 = vunpack.c.l.b16 %v295
    %v344 = vunpack.c.h.b16 %v295
    %v345 = vunpack.c.l.b16 %v296
    %v346 = vunpack.c.h.b16 %v296
    %v347 = vunpack.c.l.b16 %v297
    %v348 = vunpack.c.h.b16 %v297
    %v349 = vunpack.c.l.b16 %v298
    %v350 = vunpack.c.h.b16 %v298
    %v351 = vunpack.c.l.b16 %v299
    %v352 = vunpack.c.h.b16 %v299
    %v353 = vunpack.c.l.b16 %v300
    %v354 = vunpack.c.h.b16 %v300
    %v355 = vunpack.c.l.b16 %v301
    %v356 = vunpack.c.h.b16 %v301
    %v357 = vunpack.c.l.b16 %v302
    %v358 = vunpack.c.h.b16 %v302
    %v359 = vunpack.c.l.b16 %v303
    %v360 = vunpack.c.h.b16 %v303
    %v361 = vunpack.c.l.b16 %v304
    %v362 = vunpack.c.h.b16 %v304
    %v363 = vunpack.c.l.b16 %v305
    %v364 = vunpack.c.h.b16 %v305
    %v365 = vunpack.c.l.b16 %v306
    %v366 = vunpack.c.h.b16 %v306
    %v367 = vunpack.c.l.b16 %v307
    %v368 = vunpack.c.h.b16 %v307
    %v369 = vpack.c.b16 %v339, %v337
    %v370 = vpack.c.b16 %v340, %v338
    %v371 = vpack.c.b16 %v343, %v341
    %v372 = vpack.c.b16 %v344, %v342
    %v373 = vpack.c.b16 %v347, %v345
    %v374 = vpack.c.b16 %v348, %v346
    %v375 = vpack.c.b16 %v351, %v349
    %v376 = vpack.c.b16 %v352, %v350
    %v377 = vpack.c.b16 %v355, %v353
    %v378 = vpack.c.b16 %v356, %v354
    %v379 = vpack.c.b16 %v359, %v357
    %v380 = vpack.c.b16 %v360, %v358
    %v381 = vpack.c.b16 %v363, %v361
    %v382 = vpack.c.b16 %v364, %v362
    %v383 = vpack.c.b16 %v367, %v365
    %v384 = vpack.c.b16 %v368, %v366
    %401 = vmatprep.subr.bf16.mxu0 %v370
    %402 = vmatpush1.bf16.msra.mxu0 %v369
    %403 = vmatprep.subr.bf16.mxu0 %v372
    %404 = vmatpush1.bf16.msra.mxu0 %v371
    %405 = vmatprep.subr.bf16.mxu0 %v374
    %406 = vmatpush1.bf16.msra.mxu0 %v373
    %407 = vmatprep.subr.bf16.mxu0 %v376
    %408 = vmatpush1.bf16.msra.mxu0 %v375
    %409 = vmatprep.subr.bf16.mxu0 %v378
    %410 = vmatpush1.bf16.msra.mxu0 %v377
    %411 = vmatprep.subr.bf16.mxu0 %v380
    %412 = vmatpush1.bf16.msra.mxu0 %v379
    %413 = vmatprep.subr.bf16.mxu0 %v382
    %414 = vmatpush1.bf16.msra.mxu0 %v381
    %415 = vmatprep.subr.bf16.mxu0 %v384
    %416 = vmatpush1.bf16.msra.mxu0 %v383
    %417 = vmatprep.subr.bf16.mxu0 0
    %418 = vmatpush1.bf16.msra.mxu0 0
    %419 = vmatprep.subr.bf16.mxu0 0
    %420 = vmatpush1.bf16.msra.mxu0 0
    %421 = vmatprep.subr.bf16.mxu0 0
    %422 = vmatpush1.bf16.msra.mxu0 0
    %423 = vmatprep.subr.bf16.mxu0 0
    %424 = vmatpush1.bf16.msra.mxu0 0
    %425 = vmatprep.subr.bf16.mxu0 0
    %426 = vmatpush1.bf16.msra.mxu0 0
    %427 = vmatprep.subr.bf16.mxu0 0
    %428 = vmatpush1.bf16.msra.mxu0 0
    %429 = vmatprep.subr.bf16.mxu0 0
    %430 = vmatpush1.bf16.msra.mxu0 0
    %431 = vmatprep.subr.bf16.mxu0 0
    %432 = vmatpush1.bf16.msra.mxu0 0
    %433 = vmatprep.mubr.bf16.mxu0 0
    %434 = vmatmul.mubr.bf16.gmra.mrb[0].mxu0 %v291
    %v435 = vpop.f32.mrb[0].mxu0
    %v436 = vadd.f32 %v314, %v435
    %v437 = vpop.f32.mrb[0].mxu0
    %v438 = vadd.f32 %v318, %v437
    %v439 = vpop.f32.mrb[0].mxu0
    %v440 = vpop.f32.mrb[0].mxu0
    %441 = vdwg.mxu0
    %v442 = vmax.f32 %v436, 0.0
    %v443 = vmax.f32 %v438, 0.0
    %v444 = vpack.c.bf16 %v442, %v442
    %v445 = vpack.c.bf16 %v443, %v443
    %v446 = vld [vmem:[#allocation7] sm:$0xff]
    %v447 = vld [vmem:[#allocation7 + $0x8] sm:$0xff]
    %v448 = vld [vmem:[#allocation7 + $0x10] sm:$0xff]
    %v449 = vld [vmem:[#allocation7 + $0x18] sm:$0xff]
    %v450 = vld [vmem:[#allocation7 + $0x20] sm:$0xff]
    %v451 = vld [vmem:[#allocation7 + $0x28] sm:$0xff]
    %v452 = vld [vmem:[#allocation7 + $0x30] sm:$0xff]
    %v453 = vld [vmem:[#allocation7 + $0x38] sm:$0xff]
    %v454 = vld [vmem:[#allocation7 + $0x40] sm:$0xff]
    %v455 = vld [vmem:[#allocation7 + $0x48] sm:$0xff]
    %v456 = vld [vmem:[#allocation7 + $0x50] sm:$0xff]
    %v457 = vld [vmem:[#allocation7 + $0x58] sm:$0xff]
    %v458 = vld [vmem:[#allocation7 + $0x60] sm:$0xff]
    %v459 = vld [vmem:[#allocation7 + $0x68] sm:$0xff]
    %v460 = vld [vmem:[#allocation7 + $0x70] sm:$0xff]
    %v461 = vld [vmem:[#allocation7 + $0x78] sm:$0xff]
    %v462 = vld [vmem:[#allocation7 + $0x80] sm:$0xff]
    %v463 = vld [vmem:[#allocation7 + $0x88] sm:$0xff]
    %v464 = vld [vmem:[#allocation7 + $0x90] sm:$0xff]
    %v465 = vld [vmem:[#allocation7 + $0x98] sm:$0xff]
    %v466 = vld [vmem:[#allocation7 + $0xa0] sm:$0xff]
    %v467 = vld [vmem:[#allocation7 + $0xa8] sm:$0xff]
    %v468 = vld [vmem:[#allocation7 + $0xb0] sm:$0xff]
    %v469 = vld [vmem:[#allocation7 + $0xb8] sm:$0xff]
    %v470 = vld [vmem:[#allocation7 + $0xc0] sm:$0xff]
    %v471 = vld [vmem:[#allocation7 + $0xc8] sm:$0xff]
    %v472 = vld [vmem:[#allocation7 + $0xd0] sm:$0xff]
    %v473 = vld [vmem:[#allocation7 + $0xd8] sm:$0xff]
    %v474 = vld [vmem:[#allocation7 + $0xe0] sm:$0xff]
    %v475 = vld [vmem:[#allocation7 + $0xe8] sm:$0xff]
    %v476 = vld [vmem:[#allocation7 + $0xf0] sm:$0xff]
    %v477 = vld [vmem:[#allocation7 + $0xf8] sm:$0xff]
    %v478 = vld [vmem:[#allocation7 + $0x100] sm:$0xff]
    %v479 = vld [vmem:[#allocation7 + $0x108] sm:$0xff]
    %v480 = vld [vmem:[#allocation7 + $0x110] sm:$0xff]
    %v481 = vld [vmem:[#allocation7 + $0x118] sm:$0xff]
    %v482 = vld [vmem:[#allocation7 + $0x120] sm:$0xff]
    %v483 = vld [vmem:[#allocation7 + $0x128] sm:$0xff]
    %v484 = vld [vmem:[#allocation7 + $0x130] sm:$0xff]
    %v485 = vld [vmem:[#allocation7 + $0x138] sm:$0xff]
    %v486 = vld [vmem:[#allocation7 + $0x140] sm:$0xff]
    %v487 = vld [vmem:[#allocation7 + $0x148] sm:$0xff]
    %v488 = vld [vmem:[#allocation7 + $0x150] sm:$0xff]
    %v489 = vld [vmem:[#allocation7 + $0x158] sm:$0xff]
    %v490 = vld [vmem:[#allocation7 + $0x160] sm:$0xff]
    %v491 = vld [vmem:[#allocation7 + $0x168] sm:$0xff]
    %v492 = vld [vmem:[#allocation7 + $0x170] sm:$0xff]
    %v493 = vld [vmem:[#allocation7 + $0x178] sm:$0xff]
    %v494 = vld [vmem:[#allocation7 + $0x180] sm:$0xff]
    %v495 = vld [vmem:[#allocation7 + $0x188] sm:$0xff]
    %v496 = vld [vmem:[#allocation7 + $0x190] sm:$0xff]
    %v497 = vld [vmem:[#allocation7 + $0x198] sm:$0xff]
    %v498 = vld [vmem:[#allocation7 + $0x1a0] sm:$0xff]
    %v499 = vld [vmem:[#allocation7 + $0x1a8] sm:$0xff]
    %v500 = vld [vmem:[#allocation7 + $0x1b0] sm:$0xff]
    %v501 = vld [vmem:[#allocation7 + $0x1b8] sm:$0xff]
    %v502 = vld [vmem:[#allocation7 + $0x1c0] sm:$0xff]
    %v503 = vld [vmem:[#allocation7 + $0x1c8] sm:$0xff]
    %v504 = vld [vmem:[#allocation7 + $0x1d0] sm:$0xff]
    %v505 = vld [vmem:[#allocation7 + $0x1d8] sm:$0xff]
    %v506 = vld [vmem:[#allocation7 + $0x1e0] sm:$0xff]
    %v507 = vld [vmem:[#allocation7 + $0x1e8] sm:$0xff]
    %v508 = vld [vmem:[#allocation7 + $0x1f0] sm:$0xff]
    %v509 = vld [vmem:[#allocation7 + $0x1f8] sm:$0xff]
    %s510 = scalar_lea.vmem [#allocation8], 3
    %v511 = vld [vmem:[%s510] ss:$8 sm:$0xf]
    %v513 = vlaneseq
    %v514 = vshrl.u32 %v513, 7
    %v515 = vsub.s32 0, %v514
    %v516 = vrot.slane %v511, %v515
    %v517 = vlaneseq
    %v518 = vshrl.u32 %v517, 7
    %v519 = vsub.s32 1, %v518
    %v520 = vrot.slane %v511, %v519
    %v521 = vlaneseq
    %v522 = vshrl.u32 %v521, 7
    %v523 = vsub.s32 2, %v522
    %v524 = vrot.slane %v511, %v523
    %v525 = vlaneseq
    %v526 = vshrl.u32 %v525, 7
    %v527 = vsub.s32 3, %v526
    %v528 = vrot.slane %v511, %v527
    %v597 = vunpack.c.l.b16 %v446
    %v598 = vunpack.c.h.b16 %v446
    %v599 = vunpack.c.l.b16 %v447
    %v600 = vunpack.c.h.b16 %v447
    %v601 = vunpack.c.l.b16 %v448
    %v602 = vunpack.c.h.b16 %v448
    %v603 = vunpack.c.l.b16 %v449
    %v604 = vunpack.c.h.b16 %v449
    %v605 = vunpack.c.l.b16 %v450
    %v606 = vunpack.c.h.b16 %v450
    %v607 = vunpack.c.l.b16 %v451
    %v608 = vunpack.c.h.b16 %v451
    %v609 = vunpack.c.l.b16 %v452
    %v610 = vunpack.c.h.b16 %v452
    %v611 = vunpack.c.l.b16 %v453
    %v612 = vunpack.c.h.b16 %v453
    %v613 = vunpack.c.l.b16 %v454
    %v614 = vunpack.c.h.b16 %v454
    %v615 = vunpack.c.l.b16 %v455
    %v616 = vunpack.c.h.b16 %v455
    %v617 = vunpack.c.l.b16 %v456
    %v618 = vunpack.c.h.b16 %v456
    %v619 = vunpack.c.l.b16 %v457
    %v620 = vunpack.c.h.b16 %v457
    %v621 = vunpack.c.l.b16 %v458
    %v622 = vunpack.c.h.b16 %v458
    %v623 = vunpack.c.l.b16 %v459
    %v624 = vunpack.c.h.b16 %v459
    %v625 = vunpack.c.l.b16 %v460
    %v626 = vunpack.c.h.b16 %v460
    %v627 = vunpack.c.l.b16 %v461
    %v628 = vunpack.c.h.b16 %v461
    %v629 = vunpack.c.l.b16 %v462
    %v630 = vunpack.c.h.b16 %v462
    %v631 = vunpack.c.l.b16 %v463
    %v632 = vunpack.c.h.b16 %v463
    %v633 = vunpack.c.l.b16 %v464
    %v634 = vunpack.c.h.b16 %v464
    %v635 = vunpack.c.l.b16 %v465
    %v636 = vunpack.c.h.b16 %v465
    %v637 = vunpack.c.l.b16 %v466
    %v638 = vunpack.c.h.b16 %v466
    %v639 = vunpack.c.l.b16 %v467
    %v640 = vunpack.c.h.b16 %v467
    %v641 = vunpack.c.l.b16 %v468
    %v642 = vunpack.c.h.b16 %v468
    %v643 = vunpack.c.l.b16 %v469
    %v644 = vunpack.c.h.b16 %v469
    %v645 = vunpack.c.l.b16 %v470
    %v646 = vunpack.c.h.b16 %v470
    %v647 = vunpack.c.l.b16 %v471
    %v648 = vunpack.c.h.b16 %v471
    %v649 = vunpack.c.l.b16 %v472
    %v650 = vunpack.c.h.b16 %v472
    %v651 = vunpack.c.l.b16 %v473
    %v652 = vunpack.c.h.b16 %v473
    %v653 = vunpack.c.l.b16 %v474
    %v654 = vunpack.c.h.b16 %v474
    %v655 = vunpack.c.l.b16 %v475
    %v656 = vunpack.c.h.b16 %v475
    %v657 = vunpack.c.l.b16 %v476
    %v658 = vunpack.c.h.b16 %v476
    %v659 = vunpack.c.l.b16 %v477
    %v660 = vunpack.c.h.b16 %v477
    %v661 = vunpack.c.l.b16 %v478
    %v662 = vunpack.c.h.b16 %v478
    %v663 = vunpack.c.l.b16 %v479
    %v664 = vunpack.c.h.b16 %v479
    %v665 = vunpack.c.l.b16 %v480
    %v666 = vunpack.c.h.b16 %v480
    %v667 = vunpack.c.l.b16 %v481
    %v668 = vunpack.c.h.b16 %v481
    %v669 = vunpack.c.l.b16 %v482
    %v670 = vunpack.c.h.b16 %v482
    %v671 = vunpack.c.l.b16 %v483
    %v672 = vunpack.c.h.b16 %v483
    %v673 = vunpack.c.l.b16 %v484
    %v674 = vunpack.c.h.b16 %v484
    %v675 = vunpack.c.l.b16 %v485
    %v676 = vunpack.c.h.b16 %v485
    %v677 = vunpack.c.l.b16 %v486
    %v678 = vunpack.c.h.b16 %v486
    %v679 = vunpack.c.l.b16 %v487
    %v680 = vunpack.c.h.b16 %v487
    %v681 = vunpack.c.l.b16 %v488
    %v682 = vunpack.c.h.b16 %v488
    %v683 = vunpack.c.l.b16 %v489
    %v684 = vunpack.c.h.b16 %v489
    %v685 = vunpack.c.l.b16 %v490
    %v686 = vunpack.c.h.b16 %v490
    %v687 = vunpack.c.l.b16 %v491
    %v688 = vunpack.c.h.b16 %v491
    %v689 = vunpack.c.l.b16 %v492
    %v690 = vunpack.c.h.b16 %v492
    %v691 = vunpack.c.l.b16 %v493
    %v692 = vunpack.c.h.b16 %v493
    %v693 = vunpack.c.l.b16 %v494
    %v694 = vunpack.c.h.b16 %v494
    %v695 = vunpack.c.l.b16 %v495
    %v696 = vunpack.c.h.b16 %v495
    %v697 = vunpack.c.l.b16 %v496
    %v698 = vunpack.c.h.b16 %v496
    %v699 = vunpack.c.l.b16 %v497
    %v700 = vunpack.c.h.b16 %v497
    %v701 = vunpack.c.l.b16 %v498
    %v702 = vunpack.c.h.b16 %v498
    %v703 = vunpack.c.l.b16 %v499
    %v704 = vunpack.c.h.b16 %v499
    %v705 = vunpack.c.l.b16 %v500
    %v706 = vunpack.c.h.b16 %v500
    %v707 = vunpack.c.l.b16 %v501
    %v708 = vunpack.c.h.b16 %v501
    %v709 = vunpack.c.l.b16 %v502
    %v710 = vunpack.c.h.b16 %v502
    %v711 = vunpack.c.l.b16 %v503
    %v712 = vunpack.c.h.b16 %v503
    %v713 = vunpack.c.l.b16 %v504
    %v714 = vunpack.c.h.b16 %v504
    %v715 = vunpack.c.l.b16 %v505
    %v716 = vunpack.c.h.b16 %v505
    %v717 = vunpack.c.l.b16 %v506
    %v718 = vunpack.c.h.b16 %v506
    %v719 = vunpack.c.l.b16 %v507
    %v720 = vunpack.c.h.b16 %v507
    %v721 = vunpack.c.l.b16 %v508
    %v722 = vunpack.c.h.b16 %v508
    %v723 = vunpack.c.l.b16 %v509
    %v724 = vunpack.c.h.b16 %v509
    %v725 = vpack.c.b16 %v601, %v597
    %v726 = vpack.c.b16 %v602, %v598
    %v727 = vpack.c.b16 %v603, %v599
    %v728 = vpack.c.b16 %v604, %v600
    %v729 = vpack.c.b16 %v609, %v605
    %v730 = vpack.c.b16 %v610, %v606
    %v731 = vpack.c.b16 %v611, %v607
    %v732 = vpack.c.b16 %v612, %v608
    %v733 = vpack.c.b16 %v617, %v613
    %v734 = vpack.c.b16 %v618, %v614
    %v735 = vpack.c.b16 %v619, %v615
    %v736 = vpack.c.b16 %v620, %v616
    %v737 = vpack.c.b16 %v625, %v621
    %v738 = vpack.c.b16 %v626, %v622
    %v739 = vpack.c.b16 %v627, %v623
    %v740 = vpack.c.b16 %v628, %v624
    %v741 = vpack.c.b16 %v633, %v629
    %v742 = vpack.c.b16 %v634, %v630
    %v743 = vpack.c.b16 %v635, %v631
    %v744 = vpack.c.b16 %v636, %v632
    %v745 = vpack.c.b16 %v641, %v637
    %v746 = vpack.c.b16 %v642, %v638
    %v747 = vpack.c.b16 %v643, %v639
    %v748 = vpack.c.b16 %v644, %v640
    %v749 = vpack.c.b16 %v649, %v645
    %v750 = vpack.c.b16 %v650, %v646
    %v751 = vpack.c.b16 %v651, %v647
    %v752 = vpack.c.b16 %v652, %v648
    %v753 = vpack.c.b16 %v657, %v653
    %v754 = vpack.c.b16 %v658, %v654
    %v755 = vpack.c.b16 %v659, %v655
    %v756 = vpack.c.b16 %v660, %v656
    %v757 = vpack.c.b16 %v665, %v661
    %v758 = vpack.c.b16 %v666, %v662
    %v759 = vpack.c.b16 %v667, %v663
    %v760 = vpack.c.b16 %v668, %v664
    %v761 = vpack.c.b16 %v673, %v669
    %v762 = vpack.c.b16 %v674, %v670
    %v763 = vpack.c.b16 %v675, %v671
    %v764 = vpack.c.b16 %v676, %v672
    %v765 = vpack.c.b16 %v681, %v677
    %v766 = vpack.c.b16 %v682, %v678
    %v767 = vpack.c.b16 %v683, %v679
    %v768 = vpack.c.b16 %v684, %v680
    %v769 = vpack.c.b16 %v689, %v685
    %v770 = vpack.c.b16 %v690, %v686
    %v771 = vpack.c.b16 %v691, %v687
    %v772 = vpack.c.b16 %v692, %v688
    %v773 = vpack.c.b16 %v697, %v693
    %v774 = vpack.c.b16 %v698, %v694
    %v775 = vpack.c.b16 %v699, %v695
    %v776 = vpack.c.b16 %v700, %v696
    %v777 = vpack.c.b16 %v705, %v701
    %v778 = vpack.c.b16 %v706, %v702
    %v779 = vpack.c.b16 %v707, %v703
    %v780 = vpack.c.b16 %v708, %v704
    %v781 = vpack.c.b16 %v713, %v709
    %v782 = vpack.c.b16 %v714, %v710
    %v783 = vpack.c.b16 %v715, %v711
    %v784 = vpack.c.b16 %v716, %v712
    %v785 = vpack.c.b16 %v721, %v717
    %v786 = vpack.c.b16 %v722, %v718
    %v787 = vpack.c.b16 %v723, %v719
    %v788 = vpack.c.b16 %v724, %v720
    %853 = vmatprep.subr.bf16.mxu0 %v726
    %854 = vmatpush1.bf16.msra.mxu0 %v725
    %855 = vmatprep.subr.bf16.mxu0 %v730
    %856 = vmatpush1.bf16.msra.mxu0 %v729
    %857 = vmatprep.subr.bf16.mxu0 %v734
    %858 = vmatpush1.bf16.msra.mxu0 %v733
    %859 = vmatprep.subr.bf16.mxu0 %v738
    %860 = vmatpush1.bf16.msra.mxu0 %v737
    %861 = vmatprep.subr.bf16.mxu0 %v742
    %862 = vmatpush1.bf16.msra.mxu0 %v741
    %863 = vmatprep.subr.bf16.mxu0 %v746
    %864 = vmatpush1.bf16.msra.mxu0 %v745
    %865 = vmatprep.subr.bf16.mxu0 %v750
    %866 = vmatpush1.bf16.msra.mxu0 %v749
    %867 = vmatprep.subr.bf16.mxu0 %v754
    %868 = vmatpush1.bf16.msra.mxu0 %v753
    %869 = vmatprep.subr.bf16.mxu0 %v758
    %870 = vmatpush1.bf16.msra.mxu0 %v757
    %871 = vmatprep.subr.bf16.mxu0 %v762
    %872 = vmatpush1.bf16.msra.mxu0 %v761
    %873 = vmatprep.subr.bf16.mxu0 %v766
    %874 = vmatpush1.bf16.msra.mxu0 %v765
    %875 = vmatprep.subr.bf16.mxu0 %v770
    %876 = vmatpush1.bf16.msra.mxu0 %v769
    %877 = vmatprep.subr.bf16.mxu0 %v774
    %878 = vmatpush1.bf16.msra.mxu0 %v773
    %879 = vmatprep.subr.bf16.mxu0 %v778
    %880 = vmatpush1.bf16.msra.mxu0 %v777
    %881 = vmatprep.subr.bf16.mxu0 %v782
    %882 = vmatpush1.bf16.msra.mxu0 %v781
    %883 = vmatprep.subr.bf16.mxu0 %v786
    %884 = vmatpush1.bf16.msra.mxu0 %v785
    %885 = vmatprep.mubr.bf16.mxu0 %v445
    %886 = vmatmul.mubr.bf16.gmra.mrb[0].mxu0 %v444
    %v887 = vpop.f32.mrb[0].mxu0
    %v888 = vadd.f32 %v516, %v887
    %v889 = vpop.f32.mrb[0].mxu0
    %v890 = vadd.f32 %v520, %v889
    %v891 = vpop.f32.mrb[0].mxu0
    %v892 = vpop.f32.mrb[0].mxu0
    %893 = vdwg.mxu0
    %894 = vmatprep.subr.bf16.mxu0 %v728
    %895 = vmatpush1.bf16.msra.mxu0 %v727
    %896 = vmatprep.subr.bf16.mxu0 %v732
    %897 = vmatpush1.bf16.msra.mxu0 %v731
    %898 = vmatprep.subr.bf16.mxu0 %v736
    %899 = vmatpush1.bf16.msra.mxu0 %v735
    %900 = vmatprep.subr.bf16.mxu0 %v740
    %901 = vmatpush1.bf16.msra.mxu0 %v739
    %902 = vmatprep.subr.bf16.mxu0 %v744
    %903 = vmatpush1.bf16.msra.mxu0 %v743
    %904 = vmatprep.subr.bf16.mxu0 %v748
    %905 = vmatpush1.bf16.msra.mxu0 %v747
    %906 = vmatprep.subr.bf16.mxu0 %v752
    %907 = vmatpush1.bf16.msra.mxu0 %v751
    %908 = vmatprep.subr.bf16.mxu0 %v756
    %909 = vmatpush1.bf16.msra.mxu0 %v755
    %910 = vmatprep.subr.bf16.mxu0 %v760
    %911 = vmatpush1.bf16.msra.mxu0 %v759
    %912 = vmatprep.subr.bf16.mxu0 %v764
    %913 = vmatpush1.bf16.msra.mxu0 %v763
    %914 = vmatprep.subr.bf16.mxu0 %v768
    %915 = vmatpush1.bf16.msra.mxu0 %v767
    %916 = vmatprep.subr.bf16.mxu0 %v772
    %917 = vmatpush1.bf16.msra.mxu0 %v771
    %918 = vmatprep.subr.bf16.mxu0 %v776
    %919 = vmatpush1.bf16.msra.mxu0 %v775
    %920 = vmatprep.subr.bf16.mxu0 %v780
    %921 = vmatpush1.bf16.msra.mxu0 %v779
    %922 = vmatprep.subr.bf16.mxu0 %v784
    %923 = vmatpush1.bf16.msra.mxu0 %v783
    %924 = vmatprep.subr.bf16.mxu0 %v788
    %925 = vmatpush1.bf16.msra.mxu0 %v787
    %926 = vmatprep.mubr.bf16.mxu0 %v445
    %927 = vmatmul.mubr.bf16.gmra.mrb[0].mxu0 %v444
    %v928 = vpop.f32.mrb[0].mxu0
    %v929 = vadd.f32 %v524, %v928
    %v930 = vpop.f32.mrb[0].mxu0
    %v931 = vadd.f32 %v528, %v930
    %v932 = vpop.f32.mrb[0].mxu0
    %v933 = vpop.f32.mrb[0].mxu0
    %934 = vdwg.mxu0
    %v935 = vmax.f32 %v888, 0.0
    %v936 = vmax.f32 %v890, 0.0
    %v937 = vmax.f32 %v929, 0.0
    %v938 = vmax.f32 %v931, 0.0
    %v939 = vpack.c.bf16 %v935, %v935
    %v940 = vpack.c.bf16 %v936, %v936
    %v941 = vpack.c.bf16 %v937, %v937
    %v942 = vpack.c.bf16 %v938, %v938
    %v943 = vld [vmem:[#allocation5 + $0x80] sm:$0xff]
    %v944 = vld [vmem:[#allocation5 + $0x88] sm:$0xff]
    %v945 = vld [vmem:[#allocation5 + $0x90] sm:$0xff]
    %v946 = vld [vmem:[#allocation5 + $0x98] sm:$0xff]
    %v947 = vld [vmem:[#allocation5 + $0xa0] sm:$0xff]
    %v948 = vld [vmem:[#allocation5 + $0xa8] sm:$0xff]
    %v949 = vld [vmem:[#allocation5 + $0xb0] sm:$0xff]
    %v950 = vld [vmem:[#allocation5 + $0xb8] sm:$0xff]
    %v951 = vld [vmem:[#allocation5 + $0xc0] sm:$0xff]
    %v952 = vld [vmem:[#allocation5 + $0xc8] sm:$0xff]
    %v953 = vld [vmem:[#allocation5 + $0xd0] sm:$0xff]
    %v954 = vld [vmem:[#allocation5 + $0xd8] sm:$0xff]
    %v955 = vld [vmem:[#allocation5 + $0xe0] sm:$0xff]
    %v956 = vld [vmem:[#allocation5 + $0xe8] sm:$0xff]
    %v957 = vld [vmem:[#allocation5 + $0xf0] sm:$0xff]
    %v958 = vld [vmem:[#allocation5 + $0xf8] sm:$0xff]
    %v959 = vld [vmem:[#allocation5 + $0x100] sm:$0xff]
    %v960 = vld [vmem:[#allocation5 + $0x108] sm:$0xff]
    %v961 = vld [vmem:[#allocation5 + $0x110] sm:$0xff]
    %v962 = vld [vmem:[#allocation5 + $0x118] sm:$0xff]
    %v963 = vld [vmem:[#allocation5 + $0x120] sm:$0xff]
    %v964 = vld [vmem:[#allocation5 + $0x128] sm:$0xff]
    %v965 = vld [vmem:[#allocation5 + $0x130] sm:$0xff]
    %v966 = vld [vmem:[#allocation5 + $0x138] sm:$0xff]
    %v967 = vld [vmem:[#allocation5 + $0x140] sm:$0xff]
    %v968 = vld [vmem:[#allocation5 + $0x148] sm:$0xff]
    %v969 = vld [vmem:[#allocation5 + $0x150] sm:$0xff]
    %v970 = vld [vmem:[#allocation5 + $0x158] sm:$0xff]
    %v971 = vld [vmem:[#allocation5 + $0x160] sm:$0xff]
    %v972 = vld [vmem:[#allocation5 + $0x168] sm:$0xff]
    %v973 = vld [vmem:[#allocation5 + $0x170] sm:$0xff]
    %v974 = vld [vmem:[#allocation5 + $0x178] sm:$0xff]
    %v975 = vld [vmem:[#allocation5 + $0x180] sm:$0xff]
    %v976 = vld [vmem:[#allocation5 + $0x188] sm:$0xff]
    %v977 = vld [vmem:[#allocation5 + $0x190] sm:$0xff]
    %v978 = vld [vmem:[#allocation5 + $0x198] sm:$0xff]
    %v979 = vld [vmem:[#allocation5 + $0x1a0] sm:$0xff]
    %v980 = vld [vmem:[#allocation5 + $0x1a8] sm:$0xff]
    %v981 = vld [vmem:[#allocation5 + $0x1b0] sm:$0xff]
    %v982 = vld [vmem:[#allocation5 + $0x1b8] sm:$0xff]
    %v983 = vld [vmem:[#allocation5 + $0x1c0] sm:$0xff]
    %v984 = vld [vmem:[#allocation5 + $0x1c8] sm:$0xff]
    %v985 = vld [vmem:[#allocation5 + $0x1d0] sm:$0xff]
    %v986 = vld [vmem:[#allocation5 + $0x1d8] sm:$0xff]
    %v987 = vld [vmem:[#allocation5 + $0x1e0] sm:$0xff]
    %v988 = vld [vmem:[#allocation5 + $0x1e8] sm:$0xff]
    %v989 = vld [vmem:[#allocation5 + $0x1f0] sm:$0xff]
    %v990 = vld [vmem:[#allocation5 + $0x1f8] sm:$0xff]
    %v991 = vld [vmem:[#allocation5 + $0x200] sm:$0xff]
    %v992 = vld [vmem:[#allocation5 + $0x208] sm:$0xff]
    %v993 = vld [vmem:[#allocation5 + $0x210] sm:$0xff]
    %v994 = vld [vmem:[#allocation5 + $0x218] sm:$0xff]
    %v995 = vld [vmem:[#allocation5 + $0x220] sm:$0xff]
    %v996 = vld [vmem:[#allocation5 + $0x228] sm:$0xff]
    %v997 = vld [vmem:[#allocation5 + $0x230] sm:$0xff]
    %v998 = vld [vmem:[#allocation5 + $0x238] sm:$0xff]
    %v999 = vld [vmem:[#allocation5 + $0x240] sm:$0xff]
    %v1000 = vld [vmem:[#allocation5 + $0x248] sm:$0xff]
    %v1001 = vld [vmem:[#allocation5 + $0x250] sm:$0xff]
    %v1002 = vld [vmem:[#allocation5 + $0x258] sm:$0xff]
    %v1003 = vld [vmem:[#allocation5 + $0x260] sm:$0xff]
    %v1004 = vld [vmem:[#allocation5 + $0x268] sm:$0xff]
    %v1005 = vld [vmem:[#allocation5 + $0x270] sm:$0xff]
    %v1006 = vld [vmem:[#allocation5 + $0x278] sm:$0xff]
    %s1007 = scalar_lea.vmem [#allocation8], 4
    %v1008 = vld [vmem:[%s1007] ss:$8 sm:$0x3]
    %v1010 = vlaneseq
    %v1011 = vshrl.u32 %v1010, 7
    %v1012 = vsub.s32 0, %v1011
    %v1013 = vrot.slane %v1008, %v1012
    %v1014 = vlaneseq
    %v1015 = vshrl.u32 %v1014, 7
    %v1016 = vsub.s32 1, %v1015
    %v1017 = vrot.slane %v1008, %v1016
    %v1084 = vunpack.c.l.b16 %v943
    %v1085 = vunpack.c.h.b16 %v943
    %v1086 = vunpack.c.l.b16 %v944
    %v1087 = vunpack.c.h.b16 %v944
    %v1088 = vunpack.c.l.b16 %v945
    %v1089 = vunpack.c.h.b16 %v945
    %v1090 = vunpack.c.l.b16 %v946
    %v1091 = vunpack.c.h.b16 %v946
    %v1092 = vunpack.c.l.b16 %v947
    %v1093 = vunpack.c.h.b16 %v947
    %v1094 = vunpack.c.l.b16 %v948
    %v1095 = vunpack.c.h.b16 %v948
    %v1096 = vunpack.c.l.b16 %v949
    %v1097 = vunpack.c.h.b16 %v949
    %v1098 = vunpack.c.l.b16 %v950
    %v1099 = vunpack.c.h.b16 %v950
    %v1100 = vunpack.c.l.b16 %v951
    %v1101 = vunpack.c.h.b16 %v951
    %v1102 = vunpack.c.l.b16 %v952
    %v1103 = vunpack.c.h.b16 %v952
    %v1104 = vunpack.c.l.b16 %v953
    %v1105 = vunpack.c.h.b16 %v953
    %v1106 = vunpack.c.l.b16 %v954
    %v1107 = vunpack.c.h.b16 %v954
    %v1108 = vunpack.c.l.b16 %v955
    %v1109 = vunpack.c.h.b16 %v955
    %v1110 = vunpack.c.l.b16 %v956
    %v1111 = vunpack.c.h.b16 %v956
    %v1112 = vunpack.c.l.b16 %v957
    %v1113 = vunpack.c.h.b16 %v957
    %v1114 = vunpack.c.l.b16 %v958
    %v1115 = vunpack.c.h.b16 %v958
    %v1116 = vunpack.c.l.b16 %v959
    %v1117 = vunpack.c.h.b16 %v959
    %v1118 = vunpack.c.l.b16 %v960
    %v1119 = vunpack.c.h.b16 %v960
    %v1120 = vunpack.c.l.b16 %v961
    %v1121 = vunpack.c.h.b16 %v961
    %v1122 = vunpack.c.l.b16 %v962
    %v1123 = vunpack.c.h.b16 %v962
    %v1124 = vunpack.c.l.b16 %v963
    %v1125 = vunpack.c.h.b16 %v963
    %v1126 = vunpack.c.l.b16 %v964
    %v1127 = vunpack.c.h.b16 %v964
    %v1128 = vunpack.c.l.b16 %v965
    %v1129 = vunpack.c.h.b16 %v965
    %v1130 = vunpack.c.l.b16 %v966
    %v1131 = vunpack.c.h.b16 %v966
    %v1132 = vunpack.c.l.b16 %v967
    %v1133 = vunpack.c.h.b16 %v967
    %v1134 = vunpack.c.l.b16 %v968
    %v1135 = vunpack.c.h.b16 %v968
    %v1136 = vunpack.c.l.b16 %v969
    %v1137 = vunpack.c.h.b16 %v969
    %v1138 = vunpack.c.l.b16 %v970
    %v1139 = vunpack.c.h.b16 %v970
    %v1140 = vunpack.c.l.b16 %v971
    %v1141 = vunpack.c.h.b16 %v971
    %v1142 = vunpack.c.l.b16 %v972
    %v1143 = vunpack.c.h.b16 %v972
    %v1144 = vunpack.c.l.b16 %v973
    %v1145 = vunpack.c.h.b16 %v973
    %v1146 = vunpack.c.l.b16 %v974
    %v1147 = vunpack.c.h.b16 %v974
    %v1148 = vunpack.c.l.b16 %v975
    %v1149 = vunpack.c.h.b16 %v975
    %v1150 = vunpack.c.l.b16 %v976
    %v1151 = vunpack.c.h.b16 %v976
    %v1152 = vunpack.c.l.b16 %v977
    %v1153 = vunpack.c.h.b16 %v977
    %v1154 = vunpack.c.l.b16 %v978
    %v1155 = vunpack.c.h.b16 %v978
    %v1156 = vunpack.c.l.b16 %v979
    %v1157 = vunpack.c.h.b16 %v979
    %v1158 = vunpack.c.l.b16 %v980
    %v1159 = vunpack.c.h.b16 %v980
    %v1160 = vunpack.c.l.b16 %v981
    %v1161 = vunpack.c.h.b16 %v981
    %v1162 = vunpack.c.l.b16 %v982
    %v1163 = vunpack.c.h.b16 %v982
    %v1164 = vunpack.c.l.b16 %v983
    %v1165 = vunpack.c.h.b16 %v983
    %v1166 = vunpack.c.l.b16 %v984
    %v1167 = vunpack.c.h.b16 %v984
    %v1168 = vunpack.c.l.b16 %v985
    %v1169 = vunpack.c.h.b16 %v985
    %v1170 = vunpack.c.l.b16 %v986
    %v1171 = vunpack.c.h.b16 %v986
    %v1172 = vunpack.c.l.b16 %v987
    %v1173 = vunpack.c.h.b16 %v987
    %v1174 = vunpack.c.l.b16 %v988
    %v1175 = vunpack.c.h.b16 %v988
    %v1176 = vunpack.c.l.b16 %v989
    %v1177 = vunpack.c.h.b16 %v989
    %v1178 = vunpack.c.l.b16 %v990
    %v1179 = vunpack.c.h.b16 %v990
    %v1180 = vunpack.c.l.b16 %v991
    %v1181 = vunpack.c.h.b16 %v991
    %v1182 = vunpack.c.l.b16 %v992
    %v1183 = vunpack.c.h.b16 %v992
    %v1184 = vunpack.c.l.b16 %v993
    %v1185 = vunpack.c.h.b16 %v993
    %v1186 = vunpack.c.l.b16 %v994
    %v1187 = vunpack.c.h.b16 %v994
    %v1188 = vunpack.c.l.b16 %v995
    %v1189 = vunpack.c.h.b16 %v995
    %v1190 = vunpack.c.l.b16 %v996
    %v1191 = vunpack.c.h.b16 %v996
    %v1192 = vunpack.c.l.b16 %v997
    %v1193 = vunpack.c.h.b16 %v997
    %v1194 = vunpack.c.l.b16 %v998
    %v1195 = vunpack.c.h.b16 %v998
    %v1196 = vunpack.c.l.b16 %v999
    %v1197 = vunpack.c.h.b16 %v999
    %v1198 = vunpack.c.l.b16 %v1000
    %v1199 = vunpack.c.h.b16 %v1000
    %v1200 = vunpack.c.l.b16 %v1001
    %v1201 = vunpack.c.h.b16 %v1001
    %v1202 = vunpack.c.l.b16 %v1002
    %v1203 = vunpack.c.h.b16 %v1002
    %v1204 = vunpack.c.l.b16 %v1003
    %v1205 = vunpack.c.h.b16 %v1003
    %v1206 = vunpack.c.l.b16 %v1004
    %v1207 = vunpack.c.h.b16 %v1004
    %v1208 = vunpack.c.l.b16 %v1005
    %v1209 = vunpack.c.h.b16 %v1005
    %v1210 = vunpack.c.l.b16 %v1006
    %v1211 = vunpack.c.h.b16 %v1006
    %v1212 = vpack.c.b16 %v1086, %v1084
    %v1213 = vpack.c.b16 %v1087, %v1085
    %v1214 = vpack.c.b16 %v1090, %v1088
    %v1215 = vpack.c.b16 %v1091, %v1089
    %v1216 = vpack.c.b16 %v1094, %v1092
    %v1217 = vpack.c.b16 %v1095, %v1093
    %v1218 = vpack.c.b16 %v1098, %v1096
    %v1219 = vpack.c.b16 %v1099, %v1097
    %v1220 = vpack.c.b16 %v1102, %v1100
    %v1221 = vpack.c.b16 %v1103, %v1101
    %v1222 = vpack.c.b16 %v1106, %v1104
    %v1223 = vpack.c.b16 %v1107, %v1105
    %v1224 = vpack.c.b16 %v1110, %v1108
    %v1225 = vpack.c.b16 %v1111, %v1109
    %v1226 = vpack.c.b16 %v1114, %v1112
    %v1227 = vpack.c.b16 %v1115, %v1113
    %v1228 = vpack.c.b16 %v1118, %v1116
    %v1229 = vpack.c.b16 %v1119, %v1117
    %v1230 = vpack.c.b16 %v1122, %v1120
    %v1231 = vpack.c.b16 %v1123, %v1121
    %v1232 = vpack.c.b16 %v1126, %v1124
    %v1233 = vpack.c.b16 %v1127, %v1125
    %v1234 = vpack.c.b16 %v1130, %v1128
    %v1235 = vpack.c.b16 %v1131, %v1129
    %v1236 = vpack.c.b16 %v1134, %v1132
    %v1237 = vpack.c.b16 %v1135, %v1133
    %v1238 = vpack.c.b16 %v1138, %v1136
    %v1239 = vpack.c.b16 %v1139, %v1137
    %v1240 = vpack.c.b16 %v1142, %v1140
    %v1241 = vpack.c.b16 %v1143, %v1141
    %v1242 = vpack.c.b16 %v1146, %v1144
    %v1243 = vpack.c.b16 %v1147, %v1145
    %v1244 = vpack.c.b16 %v1150, %v1148
    %v1245 = vpack.c.b16 %v1151, %v1149
    %v1246 = vpack.c.b16 %v1154, %v1152
    %v1247 = vpack.c.b16 %v1155, %v1153
    %v1248 = vpack.c.b16 %v1158, %v1156
    %v1249 = vpack.c.b16 %v1159, %v1157
    %v1250 = vpack.c.b16 %v1162, %v1160
    %v1251 = vpack.c.b16 %v1163, %v1161
    %v1252 = vpack.c.b16 %v1166, %v1164
    %v1253 = vpack.c.b16 %v1167, %v1165
    %v1254 = vpack.c.b16 %v1170, %v1168
    %v1255 = vpack.c.b16 %v1171, %v1169
    %v1256 = vpack.c.b16 %v1174, %v1172
    %v1257 = vpack.c.b16 %v1175, %v1173
    %v1258 = vpack.c.b16 %v1178, %v1176
    %v1259 = vpack.c.b16 %v1179, %v1177
    %v1260 = vpack.c.b16 %v1182, %v1180
    %v1261 = vpack.c.b16 %v1183, %v1181
    %v1262 = vpack.c.b16 %v1186, %v1184
    %v1263 = vpack.c.b16 %v1187, %v1185
    %v1264 = vpack.c.b16 %v1190, %v1188
    %v1265 = vpack.c.b16 %v1191, %v1189
    %v1266 = vpack.c.b16 %v1194, %v1192
    %v1267 = vpack.c.b16 %v1195, %v1193
    %v1268 = vpack.c.b16 %v1198, %v1196
    %v1269 = vpack.c.b16 %v1199, %v1197
    %v1270 = vpack.c.b16 %v1202, %v1200
    %v1271 = vpack.c.b16 %v1203, %v1201
    %v1272 = vpack.c.b16 %v1206, %v1204
    %v1273 = vpack.c.b16 %v1207, %v1205
    %v1274 = vpack.c.b16 %v1210, %v1208
    %v1275 = vpack.c.b16 %v1211, %v1209
    %1340 = vmatprep.subr.bf16.mxu0 %v1213
    %1341 = vmatpush1.bf16.msra.mxu0 %v1212
    %1342 = vmatprep.subr.bf16.mxu0 %v1215
    %1343 = vmatpush1.bf16.msra.mxu0 %v1214
    %1344 = vmatprep.subr.bf16.mxu0 %v1217
    %1345 = vmatpush1.bf16.msra.mxu0 %v1216
    %1346 = vmatprep.subr.bf16.mxu0 %v1219
    %1347 = vmatpush1.bf16.msra.mxu0 %v1218
    %1348 = vmatprep.subr.bf16.mxu0 %v1221
    %1349 = vmatpush1.bf16.msra.mxu0 %v1220
    %1350 = vmatprep.subr.bf16.mxu0 %v1223
    %1351 = vmatpush1.bf16.msra.mxu0 %v1222
    %1352 = vmatprep.subr.bf16.mxu0 %v1225
    %1353 = vmatpush1.bf16.msra.mxu0 %v1224
    %1354 = vmatprep.subr.bf16.mxu0 %v1227
    %1355 = vmatpush1.bf16.msra.mxu0 %v1226
    %1356 = vmatprep.subr.bf16.mxu0 %v1229
    %1357 = vmatpush1.bf16.msra.mxu0 %v1228
    %1358 = vmatprep.subr.bf16.mxu0 %v1231
    %1359 = vmatpush1.bf16.msra.mxu0 %v1230
    %1360 = vmatprep.subr.bf16.mxu0 %v1233
    %1361 = vmatpush1.bf16.msra.mxu0 %v1232
    %1362 = vmatprep.subr.bf16.mxu0 %v1235
    %1363 = vmatpush1.bf16.msra.mxu0 %v1234
    %1364 = vmatprep.subr.bf16.mxu0 %v1237
    %1365 = vmatpush1.bf16.msra.mxu0 %v1236
    %1366 = vmatprep.subr.bf16.mxu0 %v1239
    %1367 = vmatpush1.bf16.msra.mxu0 %v1238
    %1368 = vmatprep.subr.bf16.mxu0 %v1241
    %1369 = vmatpush1.bf16.msra.mxu0 %v1240
    %1370 = vmatprep.subr.bf16.mxu0 %v1243
    %1371 = vmatpush1.bf16.msra.mxu0 %v1242
    %1372 = vmatprep.mubr.bf16.mxu0 %v940
    %1373 = vmatmul.mubr.bf16.gmra.mrb[0].mxu0 %v939
    %v1374 = vpop.f32.mrb[0].mxu0
    %v1375 = vadd.f32 %v1013, %v1374
    %v1376 = vpop.f32.mrb[0].mxu0
    %v1377 = vadd.f32 %v1017, %v1376
    %v1378 = vpop.f32.mrb[0].mxu0
    %v1379 = vpop.f32.mrb[0].mxu0
    %1380 = vdwg.mxu0
    %1381 = vmatprep.subr.bf16.mxu0 %v1245
    %1382 = vmatpush1.bf16.msra.mxu0 %v1244
    %1383 = vmatprep.subr.bf16.mxu0 %v1247
    %1384 = vmatpush1.bf16.msra.mxu0 %v1246
    %1385 = vmatprep.subr.bf16.mxu0 %v1249
    %1386 = vmatpush1.bf16.msra.mxu0 %v1248
    %1387 = vmatprep.subr.bf16.mxu0 %v1251
    %1388 = vmatpush1.bf16.msra.mxu0 %v1250
    %1389 = vmatprep.subr.bf16.mxu0 %v1253
    %1390 = vmatpush1.bf16.msra.mxu0 %v1252
    %1391 = vmatprep.subr.bf16.mxu0 %v1255
    %1392 = vmatpush1.bf16.msra.mxu0 %v1254
    %1393 = vmatprep.subr.bf16.mxu0 %v1257
    %1394 = vmatpush1.bf16.msra.mxu0 %v1256
    %1395 = vmatprep.subr.bf16.mxu0 %v1259
    %1396 = vmatpush1.bf16.msra.mxu0 %v1258
    %1397 = vmatprep.subr.bf16.mxu0 %v1261
    %1398 = vmatpush1.bf16.msra.mxu0 %v1260
    %1399 = vmatprep.subr.bf16.mxu0 %v1263
    %1400 = vmatpush1.bf16.msra.mxu0 %v1262
    %1401 = vmatprep.subr.bf16.mxu0 %v1265
    %1402 = vmatpush1.bf16.msra.mxu0 %v1264
    %1403 = vmatprep.subr.bf16.mxu0 %v1267
    %1404 = vmatpush1.bf16.msra.mxu0 %v1266
    %1405 = vmatprep.subr.bf16.mxu0 %v1269
    %1406 = vmatpush1.bf16.msra.mxu0 %v1268
    %1407 = vmatprep.subr.bf16.mxu0 %v1271
    %1408 = vmatpush1.bf16.msra.mxu0 %v1270
    %1409 = vmatprep.subr.bf16.mxu0 %v1273
    %1410 = vmatpush1.bf16.msra.mxu0 %v1272
    %1411 = vmatprep.subr.bf16.mxu0 %v1275
    %1412 = vmatpush1.bf16.msra.mxu0 %v1274
    %1413 = vmatprep.mubr.bf16.mxu0 %v942
    %1414 = vmatmul.mubr.bf16.gmra.mrb[0].mxu0 %v941
    %v1415 = vpop.f32.mrb[0].mxu0
    %v1416 = vadd.f32 %v1375, %v1415
    %v1417 = vpop.f32.mrb[0].mxu0
    %v1418 = vadd.f32 %v1377, %v1417
    %v1419 = vpop.f32.mrb[0].mxu0
    %v1420 = vpop.f32.mrb[0].mxu0
    %1421 = vdwg.mxu0
    %v1422 = vmax.f32 %v1416, 0.0
    %v1423 = vmax.f32 %v1418, 0.0
    %v1424 = vpack.c.bf16 %v1422, %v1422
    %v1425 = vpack.c.bf16 %v1423, %v1423
    %v1426 = vld [vmem:[#allocation2 + $0x80] sm:$0xf]
    %v1427 = vld [vmem:[#allocation2 + $0x84] sm:$0xf]
    %v1428 = vld [vmem:[#allocation2 + $0x88] sm:$0xf]
    %v1429 = vld [vmem:[#allocation2 + $0x8c] sm:$0xf]
    %v1430 = vld [vmem:[#allocation2 + $0x90] sm:$0xf]
    %v1431 = vld [vmem:[#allocation2 + $0x94] sm:$0xf]
    %v1432 = vld [vmem:[#allocation2 + $0x98] sm:$0xf]
    %v1433 = vld [vmem:[#allocation2 + $0x9c] sm:$0xf]
    %v1434 = vld [vmem:[#allocation2 + $0xa0] sm:$0xf]
    %v1435 = vld [vmem:[#allocation2 + $0xa4] sm:$0xf]
    %v1436 = vld [vmem:[#allocation2 + $0xa8] sm:$0xf]
    %v1437 = vld [vmem:[#allocation2 + $0xac] sm:$0xf]
    %v1438 = vld [vmem:[#allocation2 + $0xb0] sm:$0xf]
    %v1439 = vld [vmem:[#allocation2 + $0xb4] sm:$0xf]
    %v1440 = vld [vmem:[#allocation2 + $0xb8] sm:$0xf]
    %v1441 = vld [vmem:[#allocation2 + $0xbc] sm:$0xf]
    %v1442 = vld [vmem:[#allocation2 + $0xc0] sm:$0xf]
    %v1443 = vld [vmem:[#allocation2 + $0xc4] sm:$0xf]
    %v1444 = vld [vmem:[#allocation2 + $0xc8] sm:$0xf]
    %v1445 = vld [vmem:[#allocation2 + $0xcc] sm:$0xf]
    %v1446 = vld [vmem:[#allocation2 + $0xd0] sm:$0xf]
    %v1447 = vld [vmem:[#allocation2 + $0xd4] sm:$0xf]
    %v1448 = vld [vmem:[#allocation2 + $0xd8] sm:$0xf]
    %v1449 = vld [vmem:[#allocation2 + $0xdc] sm:$0xf]
    %v1450 = vld [vmem:[#allocation2 + $0xe0] sm:$0xf]
    %v1451 = vld [vmem:[#allocation2 + $0xe4] sm:$0xf]
    %v1452 = vld [vmem:[#allocation2 + $0xe8] sm:$0xf]
    %v1453 = vld [vmem:[#allocation2 + $0xec] sm:$0xf]
    %v1454 = vld [vmem:[#allocation2 + $0xf0] sm:$0xf]
    %v1455 = vld [vmem:[#allocation2 + $0xf4] sm:$0xf]
    %v1456 = vld [vmem:[#allocation2 + $0xf8] sm:$0xf]
    %v1457 = vld [vmem:[#allocation2 + $0xfc] sm:$0xf]
    %v1458 = vld [vmem:[#allocation8 + $0x5] ss:$0 sm:$0xff]
    %v1491 = vunpack.c.l.b16 %v1426
    %v1492 = vunpack.c.l.b16 %v1427
    %v1493 = vunpack.c.l.b16 %v1428
    %v1494 = vunpack.c.l.b16 %v1429
    %v1495 = vunpack.c.l.b16 %v1430
    %v1496 = vunpack.c.l.b16 %v1431
    %v1497 = vunpack.c.l.b16 %v1432
    %v1498 = vunpack.c.l.b16 %v1433
    %v1499 = vunpack.c.l.b16 %v1434
    %v1500 = vunpack.c.l.b16 %v1435
    %v1501 = vunpack.c.l.b16 %v1436
    %v1502 = vunpack.c.l.b16 %v1437
    %v1503 = vunpack.c.l.b16 %v1438
    %v1504 = vunpack.c.l.b16 %v1439
    %v1505 = vunpack.c.l.b16 %v1440
    %v1506 = vunpack.c.l.b16 %v1441
    %v1507 = vunpack.c.l.b16 %v1442
    %v1508 = vunpack.c.l.b16 %v1443
    %v1509 = vunpack.c.l.b16 %v1444
    %v1510 = vunpack.c.l.b16 %v1445
    %v1511 = vunpack.c.l.b16 %v1446
    %v1512 = vunpack.c.l.b16 %v1447
    %v1513 = vunpack.c.l.b16 %v1448
    %v1514 = vunpack.c.l.b16 %v1449
    %v1515 = vunpack.c.l.b16 %v1450
    %v1516 = vunpack.c.l.b16 %v1451
    %v1517 = vunpack.c.l.b16 %v1452
    %v1518 = vunpack.c.l.b16 %v1453
    %v1519 = vunpack.c.l.b16 %v1454
    %v1520 = vunpack.c.l.b16 %v1455
    %v1521 = vunpack.c.l.b16 %v1456
    %v1522 = vunpack.c.l.b16 %v1457
    %v1523 = vpack.c.b16 %v1492, %v1491
    %v1524 = vpack.c.b16 %v1494, %v1493
    %v1525 = vpack.c.b16 %v1496, %v1495
    %v1526 = vpack.c.b16 %v1498, %v1497
    %v1527 = vpack.c.b16 %v1500, %v1499
    %v1528 = vpack.c.b16 %v1502, %v1501
    %v1529 = vpack.c.b16 %v1504, %v1503
    %v1530 = vpack.c.b16 %v1506, %v1505
    %v1531 = vpack.c.b16 %v1508, %v1507
    %v1532 = vpack.c.b16 %v1510, %v1509
    %v1533 = vpack.c.b16 %v1512, %v1511
    %v1534 = vpack.c.b16 %v1514, %v1513
    %v1535 = vpack.c.b16 %v1516, %v1515
    %v1536 = vpack.c.b16 %v1518, %v1517
    %v1537 = vpack.c.b16 %v1520, %v1519
    %v1538 = vpack.c.b16 %v1522, %v1521
    %1555 = vmatprep.subr.bf16.mxu0 0
    %1556 = vmatpush1.bf16.msra.mxu0 %v1523
    %1557 = vmatprep.subr.bf16.mxu0 0
    %1558 = vmatpush1.bf16.msra.mxu0 %v1524
    %1559 = vmatprep.subr.bf16.mxu0 0
    %1560 = vmatpush1.bf16.msra.mxu0 %v1525
    %1561 = vmatprep.subr.bf16.mxu0 0
    %1562 = vmatpush1.bf16.msra.mxu0 %v1526
    %1563 = vmatprep.subr.bf16.mxu0 0
    %1564 = vmatpush1.bf16.msra.mxu0 %v1527
    %1565 = vmatprep.subr.bf16.mxu0 0
    %1566 = vmatpush1.bf16.msra.mxu0 %v1528
    %1567 = vmatprep.subr.bf16.mxu0 0
    %1568 = vmatpush1.bf16.msra.mxu0 %v1529
    %1569 = vmatprep.subr.bf16.mxu0 0
    %1570 = vmatpush1.bf16.msra.mxu0 %v1530
    %1571 = vmatprep.subr.bf16.mxu0 0
    %1572 = vmatpush1.bf16.msra.mxu0 %v1531
    %1573 = vmatprep.subr.bf16.mxu0 0
    %1574 = vmatpush1.bf16.msra.mxu0 %v1532
    %1575 = vmatprep.subr.bf16.mxu0 0
    %1576 = vmatpush1.bf16.msra.mxu0 %v1533
    %1577 = vmatprep.subr.bf16.mxu0 0
    %1578 = vmatpush1.bf16.msra.mxu0 %v1534
    %1579 = vmatprep.subr.bf16.mxu0 0
    %1580 = vmatpush1.bf16.msra.mxu0 %v1535
    %1581 = vmatprep.subr.bf16.mxu0 0
    %1582 = vmatpush1.bf16.msra.mxu0 %v1536
    %1583 = vmatprep.subr.bf16.mxu0 0
    %1584 = vmatpush1.bf16.msra.mxu0 %v1537
    %1585 = vmatprep.subr.bf16.mxu0 0
    %1586 = vmatpush1.bf16.msra.mxu0 %v1538
    %1587 = vmatprep.mubr.bf16.mxu0 %v1425
    %1588 = vmatmul.mubr.bf16.gmra.mrb[0].mxu0 %v1424
    %v1589 = vpop.f32.mrb[0].mxu0
    %v1590 = vadd.f32 %v1458, %v1589
    %v1591 = vpop.f32.mrb[0].mxu0
    %v1592 = vpop.f32.mrb[0].mxu0
    %v1593 = vpop.f32.mrb[0].mxu0
    %1594 = vdwg.mxu0
    %v1595 = vmax.f32 %v1590, 0.0
    %v1596 = vpack.c.bf16 %v1595, %v1595
    %v1597 = vld [vmem:[#allocation2 + $0x100] sm:$0xf]
    %v1598 = vld [vmem:[#allocation2 + $0x104] sm:$0xf]
    %v1599 = vld [vmem:[#allocation2 + $0x108] sm:$0xf]
    %v1600 = vld [vmem:[#allocation2 + $0x10c] sm:$0xf]
    %v1601 = vld [vmem:[#allocation2 + $0x110] sm:$0xf]
    %v1602 = vld [vmem:[#allocation2 + $0x114] sm:$0xf]
    %v1603 = vld [vmem:[#allocation2 + $0x118] sm:$0xf]
    %v1604 = vld [vmem:[#allocation2 + $0x11c] sm:$0xf]
    %v1605 = vld [vmem:[#allocation2 + $0x120] sm:$0xf]
    %v1606 = vld [vmem:[#allocation2 + $0x124] sm:$0xf]
    %v1607 = vld [vmem:[#allocation2 + $0x128] sm:$0xf]
    %v1608 = vld [vmem:[#allocation2 + $0x12c] sm:$0xf]
    %v1609 = vld [vmem:[#allocation2 + $0x130] sm:$0xf]
    %v1610 = vld [vmem:[#allocation2 + $0x134] sm:$0xf]
    %v1611 = vld [vmem:[#allocation2 + $0x138] sm:$0xf]
    %v1612 = vld [vmem:[#allocation2 + $0x13c] sm:$0xf]
    %v1613 = vld [vmem:[#allocation8 + $0x6] ss:$0 sm:$0xff]
    %v1630 = vunpack.c.l.b16 %v1597
    %v1631 = vunpack.c.l.b16 %v1598
    %v1632 = vunpack.c.l.b16 %v1599
    %v1633 = vunpack.c.l.b16 %v1600
    %v1634 = vunpack.c.l.b16 %v1601
    %v1635 = vunpack.c.l.b16 %v1602
    %v1636 = vunpack.c.l.b16 %v1603
    %v1637 = vunpack.c.l.b16 %v1604
    %v1638 = vunpack.c.l.b16 %v1605
    %v1639 = vunpack.c.l.b16 %v1606
    %v1640 = vunpack.c.l.b16 %v1607
    %v1641 = vunpack.c.l.b16 %v1608
    %v1642 = vunpack.c.l.b16 %v1609
    %v1643 = vunpack.c.l.b16 %v1610
    %v1644 = vunpack.c.l.b16 %v1611
    %v1645 = vunpack.c.l.b16 %v1612
    %v1646 = vpack.c.b16 %v1631, %v1630
    %v1647 = vpack.c.b16 %v1633, %v1632
    %v1648 = vpack.c.b16 %v1635, %v1634
    %v1649 = vpack.c.b16 %v1637, %v1636
    %v1650 = vpack.c.b16 %v1639, %v1638
    %v1651 = vpack.c.b16 %v1641, %v1640
    %v1652 = vpack.c.b16 %v1643, %v1642
    %v1653 = vpack.c.b16 %v1645, %v1644
    %1662 = vmatprep.subr.bf16.mxu0 0
    %1663 = vmatpush1.bf16.msra.mxu0 %v1646
    %1664 = vmatprep.subr.bf16.mxu0 0
    %1665 = vmatpush1.bf16.msra.mxu0 %v1647
    %1666 = vmatprep.subr.bf16.mxu0 0
    %1667 = vmatpush1.bf16.msra.mxu0 %v1648
    %1668 = vmatprep.subr.bf16.mxu0 0
    %1669 = vmatpush1.bf16.msra.mxu0 %v1649
    %1670 = vmatprep.subr.bf16.mxu0 0
    %1671 = vmatpush1.bf16.msra.mxu0 %v1650
    %1672 = vmatprep.subr.bf16.mxu0 0
    %1673 = vmatpush1.bf16.msra.mxu0 %v1651
    %1674 = vmatprep.subr.bf16.mxu0 0
    %1675 = vmatpush1.bf16.msra.mxu0 %v1652
    %1676 = vmatprep.subr.bf16.mxu0 0
    %1677 = vmatpush1.bf16.msra.mxu0 %v1653
    %1678 = vmatprep.subr.bf16.mxu0 0
    %1679 = vmatpush1.bf16.msra.mxu0 0
    %1680 = vmatprep.subr.bf16.mxu0 0
    %1681 = vmatpush1.bf16.msra.mxu0 0
    %1682 = vmatprep.subr.bf16.mxu0 0
    %1683 = vmatpush1.bf16.msra.mxu0 0
    %1684 = vmatprep.subr.bf16.mxu0 0
    %1685 = vmatpush1.bf16.msra.mxu0 0
    %1686 = vmatprep.subr.bf16.mxu0 0
    %1687 = vmatpush1.bf16.msra.mxu0 0
    %1688 = vmatprep.subr.bf16.mxu0 0
    %1689 = vmatpush1.bf16.msra.mxu0 0
    %1690 = vmatprep.subr.bf16.mxu0 0
    %1691 = vmatpush1.bf16.msra.mxu0 0
    %1692 = vmatprep.subr.bf16.mxu0 0
    %1693 = vmatpush1.bf16.msra.mxu0 0
    %1694 = vmatprep.mubr.bf16.mxu0 0
    %1695 = vmatmul.mubr.bf16.gmra.mrb[0].mxu0 %v1596
    %v1696 = vpop.f32.mrb[0].mxu0
    %v1697 = vadd.f32 %v1613, %v1696
    %v1698 = vpop.f32.mrb[0].mxu0
    %v1699 = vpop.f32.mrb[0].mxu0
    %v1700 = vpop.f32.mrb[0].mxu0
    %1701 = vdwg.mxu0
    %v1702 = vmax.f32 %v1697, 0.0
    %v1703 = vpack.c.bf16 %v1702, %v1702
    %v1704 = vld [vmem:[#allocation2 + $0x140] sm:$0xf]
    %v1705 = vld [vmem:[#allocation2 + $0x144] sm:$0xf]
    %v1706 = vld [vmem:[#allocation2 + $0x148] sm:$0xf]
    %v1707 = vld [vmem:[#allocation2 + $0x14c] sm:$0xf]
    %v1708 = vld [vmem:[#allocation2 + $0x150] sm:$0xf]
    %v1709 = vld [vmem:[#allocation2 + $0x154] sm:$0xf]
    %v1710 = vld [vmem:[#allocation2 + $0x158] sm:$0xf]
    %v1711 = vld [vmem:[#allocation2 + $0x15c] sm:$0xf]
    %v1712 = vld [vmem:[#allocation2 + $0x160] sm:$0xf]
    %v1713 = vld [vmem:[#allocation2 + $0x164] sm:$0xf]
    %v1714 = vld [vmem:[#allocation2 + $0x168] sm:$0xf]
    %v1715 = vld [vmem:[#allocation2 + $0x16c] sm:$0xf]
    %v1716 = vld [vmem:[#allocation2 + $0x170] sm:$0xf]
    %v1717 = vld [vmem:[#allocation2 + $0x174] sm:$0xf]
    %v1718 = vld [vmem:[#allocation2 + $0x178] sm:$0xf]
    %v1719 = vld [vmem:[#allocation2 + $0x17c] sm:$0xf]
    %v1720 = vld [vmem:[#allocation8 + $0x7] ss:$0 sm:$0xff]
    %v1737 = vunpack.c.l.b16 %v1704
    %v1738 = vunpack.c.l.b16 %v1705
    %v1739 = vunpack.c.l.b16 %v1706
    %v1740 = vunpack.c.l.b16 %v1707
    %v1741 = vunpack.c.l.b16 %v1708
    %v1742 = vunpack.c.l.b16 %v1709
    %v1743 = vunpack.c.l.b16 %v1710
    %v1744 = vunpack.c.l.b16 %v1711
    %v1745 = vunpack.c.l.b16 %v1712
    %v1746 = vunpack.c.l.b16 %v1713
    %v1747 = vunpack.c.l.b16 %v1714
    %v1748 = vunpack.c.l.b16 %v1715
    %v1749 = vunpack.c.l.b16 %v1716
    %v1750 = vunpack.c.l.b16 %v1717
    %v1751 = vunpack.c.l.b16 %v1718
    %v1752 = vunpack.c.l.b16 %v1719
    %v1753 = vpack.c.b16 %v1738, %v1737
    %v1754 = vpack.c.b16 %v1740, %v1739
    %v1755 = vpack.c.b16 %v1742, %v1741
    %v1756 = vpack.c.b16 %v1744, %v1743
    %v1757 = vpack.c.b16 %v1746, %v1745
    %v1758 = vpack.c.b16 %v1748, %v1747
    %v1759 = vpack.c.b16 %v1750, %v1749
    %v1760 = vpack.c.b16 %v1752, %v1751
    %1769 = vmatprep.subr.bf16.mxu0 0
    %1770 = vmatpush1.bf16.msra.mxu0 %v1753
    %1771 = vmatprep.subr.bf16.mxu0 0
    %1772 = vmatpush1.bf16.msra.mxu0 %v1754
    %1773 = vmatprep.subr.bf16.mxu0 0
    %1774 = vmatpush1.bf16.msra.mxu0 %v1755
    %1775 = vmatprep.subr.bf16.mxu0 0
    %1776 = vmatpush1.bf16.msra.mxu0 %v1756
    %1777 = vmatprep.subr.bf16.mxu0 0
    %1778 = vmatpush1.bf16.msra.mxu0 %v1757
    %1779 = vmatprep.subr.bf16.mxu0 0
    %1780 = vmatpush1.bf16.msra.mxu0 %v1758
    %1781 = vmatprep.subr.bf16.mxu0 0
    %1782 = vmatpush1.bf16.msra.mxu0 %v1759
    %1783 = vmatprep.subr.bf16.mxu0 0
    %1784 = vmatpush1.bf16.msra.mxu0 %v1760
    %1785 = vmatprep.subr.bf16.mxu0 0
    %1786 = vmatpush1.bf16.msra.mxu0 0
    %1787 = vmatprep.subr.bf16.mxu0 0
    %1788 = vmatpush1.bf16.msra.mxu0 0
    %1789 = vmatprep.subr.bf16.mxu0 0
    %1790 = vmatpush1.bf16.msra.mxu0 0
    %1791 = vmatprep.subr.bf16.mxu0 0
    %1792 = vmatpush1.bf16.msra.mxu0 0
    %1793 = vmatprep.subr.bf16.mxu0 0
    %1794 = vmatpush1.bf16.msra.mxu0 0
    %1795 = vmatprep.subr.bf16.mxu0 0
    %1796 = vmatpush1.bf16.msra.mxu0 0
    %1797 = vmatprep.subr.bf16.mxu0 0
    %1798 = vmatpush1.bf16.msra.mxu0 0
    %1799 = vmatprep.subr.bf16.mxu0 0
    %1800 = vmatpush1.bf16.msra.mxu0 0
    %1801 = vmatprep.mubr.bf16.mxu0 0
    %1802 = vmatmul.mubr.bf16.gmra.mrb[0].mxu0 %v1703
    %v1803 = vpop.f32.mrb[0].mxu0
    %v1804 = vadd.f32 %v1720, %v1803
    %v1805 = vpop.f32.mrb[0].mxu0
    %v1806 = vpop.f32.mrb[0].mxu0
    %v1807 = vpop.f32.mrb[0].mxu0
    %1808 = vdwg.mxu0
    %v1809 = vmax.f32 %v1804, 0.0
    %v1810 = vpack.c.bf16 %v1809, %v1809
    %v1811 = vld [vmem:[#allocation2 + $0x180] sm:$0xf]
    %v1812 = vld [vmem:[#allocation2 + $0x184] sm:$0xf]
    %v1813 = vld [vmem:[#allocation2 + $0x188] sm:$0xf]
    %v1814 = vld [vmem:[#allocation2 + $0x18c] sm:$0xf]
    %v1815 = vld [vmem:[#allocation2 + $0x190] sm:$0xf]
    %v1816 = vld [vmem:[#allocation2 + $0x194] sm:$0xf]
    %v1817 = vld [vmem:[#allocation2 + $0x198] sm:$0xf]
    %v1818 = vld [vmem:[#allocation2 + $0x19c] sm:$0xf]
    %v1819 = vld [vmem:[#allocation2 + $0x1a0] sm:$0xf]
    %v1820 = vld [vmem:[#allocation2 + $0x1a4] sm:$0xf]
    %v1821 = vld [vmem:[#allocation2 + $0x1a8] sm:$0xf]
    %v1822 = vld [vmem:[#allocation2 + $0x1ac] sm:$0xf]
    %v1823 = vld [vmem:[#allocation2 + $0x1b0] sm:$0xf]
    %v1824 = vld [vmem:[#allocation2 + $0x1b4] sm:$0xf]
    %v1825 = vld [vmem:[#allocation2 + $0x1b8] sm:$0xf]
    %v1826 = vld [vmem:[#allocation2 + $0x1bc] sm:$0xf]
    %v1827 = vld [vmem:[#allocation8 + $0x20] ss:$0 sm:$0xff]
    %v1844 = vunpack.c.l.b16 %v1811
    %v1845 = vunpack.c.l.b16 %v1812
    %v1846 = vunpack.c.l.b16 %v1813
    %v1847 = vunpack.c.l.b16 %v1814
    %v1848 = vunpack.c.l.b16 %v1815
    %v1849 = vunpack.c.l.b16 %v1816
    %v1850 = vunpack.c.l.b16 %v1817
    %v1851 = vunpack.c.l.b16 %v1818
    %v1852 = vunpack.c.l.b16 %v1819
    %v1853 = vunpack.c.l.b16 %v1820
    %v1854 = vunpack.c.l.b16 %v1821
    %v1855 = vunpack.c.l.b16 %v1822
    %v1856 = vunpack.c.l.b16 %v1823
    %v1857 = vunpack.c.l.b16 %v1824
    %v1858 = vunpack.c.l.b16 %v1825
    %v1859 = vunpack.c.l.b16 %v1826
    %v1860 = vpack.c.b16 %v1845, %v1844
    %v1861 = vpack.c.b16 %v1847, %v1846
    %v1862 = vpack.c.b16 %v1849, %v1848
    %v1863 = vpack.c.b16 %v1851, %v1850
    %v1864 = vpack.c.b16 %v1853, %v1852
    %v1865 = vpack.c.b16 %v1855, %v1854
    %v1866 = vpack.c.b16 %v1857, %v1856
    %v1867 = vpack.c.b16 %v1859, %v1858
    %1876 = vmatprep.subr.bf16.mxu0 0
    %1877 = vmatpush1.bf16.msra.mxu0 %v1860
    %1878 = vmatprep.subr.bf16.mxu0 0
    %1879 = vmatpush1.bf16.msra.mxu0 %v1861
    %1880 = vmatprep.subr.bf16.mxu0 0
    %1881 = vmatpush1.bf16.msra.mxu0 %v1862
    %1882 = vmatprep.subr.bf16.mxu0 0
    %1883 = vmatpush1.bf16.msra.mxu0 %v1863
    %1884 = vmatprep.subr.bf16.mxu0 0
    %1885 = vmatpush1.bf16.msra.mxu0 %v1864
    %1886 = vmatprep.subr.bf16.mxu0 0
    %1887 = vmatpush1.bf16.msra.mxu0 %v1865
    %1888 = vmatprep.subr.bf16.mxu0 0
    %1889 = vmatpush1.bf16.msra.mxu0 %v1866
    %1890 = vmatprep.subr.bf16.mxu0 0
    %1891 = vmatpush1.bf16.msra.mxu0 %v1867
    %1892 = vmatprep.subr.bf16.mxu0 0
    %1893 = vmatpush1.bf16.msra.mxu0 0
    %1894 = vmatprep.subr.bf16.mxu0 0
    %1895 = vmatpush1.bf16.msra.mxu0 0
    %1896 = vmatprep.subr.bf16.mxu0 0
    %1897 = vmatpush1.bf16.msra.mxu0 0
    %1898 = vmatprep.subr.bf16.mxu0 0
    %1899 = vmatpush1.bf16.msra.mxu0 0
    %1900 = vmatprep.subr.bf16.mxu0 0
    %1901 = vmatpush1.bf16.msra.mxu0 0
    %1902 = vmatprep.subr.bf16.mxu0 0
    %1903 = vmatpush1.bf16.msra.mxu0 0
    %1904 = vmatprep.subr.bf16.mxu0 0
    %1905 = vmatpush1.bf16.msra.mxu0 0
    %1906 = vmatprep.subr.bf16.mxu0 0
    %1907 = vmatpush1.bf16.msra.mxu0 0
    %1908 = vmatprep.mubr.bf16.mxu0 0
    %1909 = vmatmul.mubr.bf16.gmra.mrb[0].mxu0 %v1810
    %v1910 = vpop.f32.mrb[0].mxu0
    %v1911 = vadd.f32 %v1827, %v1910
    %v1912 = vpop.f32.mrb[0].mxu0
    %v1913 = vpop.f32.mrb[0].mxu0
    %v1914 = vpop.f32.mrb[0].mxu0
    %1915 = vdwg.mxu0
    %1916 = vst [vmem:[#allocation10] sm:$0xff] %v1911
    // Predicated region
    $region38: #{simple_model_forward.1} parent=1 // pred_check
      _
    $region39: #{simple_model_forward.1} parent=1 // pred_check_branch
      %1918 = sbr.rel (0) target = $region41
    $region40: #{simple_model_forward.1} parent=1 // pred_region
      %s1920 = ssub.s32 128, 128
      %1921 = vsyncadd [#allocation4], %s1920
      %s1923 = sshll.u32 [#allocation10], 4
      %s1924 = int_to_ptr.vmem [resolvable:$true] %s1923
      %1926 = dma.vmem_to_hbm [thread:$0]  %s1924, 128, %s5, [#allocation4]
    $region41: #{simple_model_forward.1} parent=1 // pred_fallthru
      _
    // Predicated region
    $region42: #{simple_model_forward.1} parent=1 // pred_check
      _
    $region43: #{simple_model_forward.1} parent=1 // pred_check_branch
      %1928 = sbr.rel (0) target = $region45
    $region44: #{simple_model_forward.1} parent=1 // pred_region
      %1929 = dma.done [#allocation4], 128
    $region45: #{simple_model_forward.1} parent=1 // pred_fallthru
      _
    %1930 = vsyncpa [#allocation3], 1
    %1931 = vsyncpa [#allocation6], 1
    %1932 = vsyncpa [#allocation9], 1
    %1933 = vsyncpa [#allocation4], 1

</llo_original>
